<compile_context>
chip_gen: v7x
topology: tpu7x:2x2x1
jax: 0.10.0
libtpu: 0.0.40
codegen_flags: <defaults>
</compile_context>

<pallas_src>
import math

import jax
import jax.numpy as jnp
from jax import lax
from jax.experimental import pallas as pl
from jax.experimental.pallas import tpu as pltpu

EPS = 1e-5


# ----------------------------------------------------------------------------
# Pallas kernel: conv3d-as-matmul (MXU) + BN3d shift + ReLU + depthwise fuse
# (VPU reduction over depth slices) + BN2d + ReLU for one (batch, hw-tile).
# Everything is transposed: channels on sublanes, HW positions on lanes.
# ----------------------------------------------------------------------------
def convmsi_kernel(p_ref, w1_ref, sh3_ref, wf2_ref, sh2_ref, o_ref):
    # p_ref  : (CKp, t_hw)  bf16  spatial-im2col patches^T (CKp = pad16(c3*kh*kw))
    # w1_ref : (DC, CKp)    bf16  depth-expanded conv3d weight, BN3d scale folded
    # sh3_ref: (c2, 1)      f32   BN3d shift (same for every output depth)
    # wf2_ref: (DC, 1)      f32   depthwise fuse weight * BN2d scale, depth-major
    # sh2_ref: (c2, 1)      f32   BN2d shift
    # o_ref  : (c2, t_hw)         lane-dense NCHW output tile
    c2 = o_ref.shape[0]
    y = jnp.dot(w1_ref[...], p_ref[...],
                preferred_element_type=jnp.float32)        # (DC, t_hw) on the MXU
    d_out = y.shape[0] // c2
    sh3 = sh3_ref[...]                                     # (c2, 1)
    wf2 = wf2_ref[...]                                     # (DC, 1)
    z = None
    # Unrolled VPU "fuse" conv: block-diagonal structure -> per-depth slice
    # (sublane-aligned static slices, c2 is a multiple of 8).
    for d in range(d_out):
        sl = slice(d * c2, (d + 1) * c2)
        yd = jnp.maximum(y[sl, :] + sh3, 0.0)              # BN3d shift + ReLU
        yd = yd * wf2[sl, :]                               # fuse weight * BN2d scale
        z = yd if z is None else z + yd
    z = jnp.maximum(z + sh2_ref[...], 0.0)                 # BN2d shift + ReLU
    o_ref[...] = z.astype(o_ref.dtype)


# ----------------------------------------------------------------------------
# Wrapper
# ----------------------------------------------------------------------------
def convmsi_forward(x, params, k=(3, 7, 7), s=(1, 2, 2), p=(1, 3, 3),
                    out_dtype=jnp.float32):
    """x: [B, c3, H, W] (PyTorch NCHW, c1=1 implicit) -> [B, c2, H_out, W_out]."""
    B, c3, H, W = x.shape
    kt, kh, kw = k
    st, sh, sw = s
    pt, ph, pw = p
    c2 = params["w3"].shape[0]
    K2 = kh * kw
    D_out = (c3 + 2 * pt - kt) // st + 1
    H_out = (H + 2 * ph - kh) // sh + 1
    W_out = (W + 2 * pw - kw) // sw + 1
    HW = H_out * W_out
    CK = c3 * K2                         # no zero depth-pad columns
    CKp = ((CK + 15) // 16) * 16         # bf16 sublane pack only (not 128)
    DC = D_out * c2

    # ---- spatial-only im2col in bf16, transposed layout [B, CK, HW] ----------
    # Depth is kept intact and NOT padded: the Conv3d depth zero-padding is
    # handled entirely by dropping those columns from the weight matrix below.
    xb = x.astype(jnp.bfloat16)
    xpad = jnp.pad(xb, ((0, 0), (0, 0), (ph, ph), (pw, pw)))
    cols = []
    for ih in range(kh):
        for iw in range(kw):
            cols.append(xpad[:, :, ih: ih + sh * H_out: sh,
                                   iw: iw + sw * W_out: sw])   # [B, c3, Ho, Wo]
    # depth-major / kernel-minor rows, spatial last -> reshape only, no transpose.
    patches = jnp.stack(cols, axis=2).reshape(B, CK, HW)        # row = c*K2 + tap

    # ---- HW tile selection -----------------------------------------------------
    # Up to 2048 lanes per step: amortizes per-step overhead and W1 MXU weight
    # pushes while keeping the working set (~6 MB) inside v5e's 16 MiB scoped
    # default and v7x's smaller per-TC VMEM.  Prefer a divisor of HW so the
    # post-kernel crop copy disappears.
    T_CAP = 2048
    t_hw = 0
    if HW % 128 == 0:
        for cand in range(min(T_CAP, HW), 0, -128):
            if HW % cand == 0:
                t_hw = cand
                break
    if t_hw == 0:
        t_hw = min(T_CAP, ((HW + 127) // 128) * 128)
    # Guarantee >= 2 parallel grid steps when possible (v7x has 2 TensorCores).
    while B * ((HW + t_hw - 1) // t_hw) < 2 and t_hw > 128 and t_hw % 256 == 0:
        t_hw //= 2
    HW_pad = ((HW + t_hw - 1) // t_hw) * t_hw

    pad_ck = CKp - CK
    pad_hw = HW_pad - HW
    if pad_ck or pad_hw:
        patches = jnp.pad(patches, ((0, 0), (0, pad_ck), (0, pad_hw)))

    # ---- fold BatchNorms into the weights ---------------------------------------
    scale3 = params["g3"] / jnp.sqrt(params["v3"] + EPS)
    shift3 = params["b3"] - params["m3"] * scale3
    scale2 = params["g2"] / jnp.sqrt(params["v2"] + EPS)
    shift2 = params["b2"] - params["m2"] * scale2

    # Depth-expanded conv3d weight over VALID input depths only:
    #   W1[(d, c), (dp, j)] = scale3[c] * w3[c, it, j]   for dp = d*st + it - pt
    #   when dp in [0, c3); the depth-pad taps contribute zero and are dropped.
    w3 = params["w3"].reshape(c2, kt, K2)
    W1 = jnp.zeros((D_out, c2, c3, K2), jnp.float32)
    for d in range(D_out):
        for it in range(kt):
            dp = d * st + it - pt
            if 0 <= dp < c3:
                W1 = W1.at[d, :, dp, :].set(w3[:, it, :])
    W1 = (W1 * scale3[None, :, None, None]).reshape(DC, CK)
    W1 = jnp.pad(W1, ((0, 0), (0, pad_ck))).astype(jnp.bfloat16)

    sh3 = shift3.reshape(c2, 1)
    # Depthwise fuse weight with the BN2d scale folded in, depth-major so the
    # kernel takes sublane-aligned (c2, 1) slices per depth (no f32 matmul).
    wf = params["wf"].reshape(c2, D_out)
    wf2 = (wf * scale2[:, None]).T.reshape(DC, 1)
    sh2 = shift2.reshape(c2, 1)

    out = pl.pallas_call(
        convmsi_kernel,
        out_shape=jax.ShapeDtypeStruct((B, c2, HW_pad), out_dtype),
        grid_spec=pltpu.PrefetchScalarGridSpec(
            num_scalar_prefetch=0,
            grid=(B, HW_pad // t_hw),
            in_specs=[
                pl.BlockSpec((None, CKp, t_hw), lambda b, h: (b, 0, h)),
                pl.BlockSpec((DC, CKp), lambda b, h: (0, 0)),
                pl.BlockSpec((c2, 1), lambda b, h: (0, 0)),
                pl.BlockSpec((DC, 1), lambda b, h: (0, 0)),
                pl.BlockSpec((c2, 1), lambda b, h: (0, 0)),
            ],
            out_specs=pl.BlockSpec((None, c2, t_hw), lambda b, h: (b, 0, h)),
        ),
        compiler_params=pltpu.CompilerParams(
            dimension_semantics=("parallel", "parallel")),
    )(patches, W1, sh3, wf2, sh2)

    # [B, c2, HW_pad] is already NCHW-ordered.  When t_hw divides HW (the common
    # case selected above) there is no crop copy and the reshape is metadata-only.
    if HW_pad != HW:
        out = out[:, :, :HW]
    return out.reshape(B, c2, H_out, W_out)


# ----------------------------------------------------------------------------
# Pure-JAX f32 reference (independent of the im2col / folding path)
# ----------------------------------------------------------------------------
def convmsi_reference(x, params, k=(3, 7, 7), s=(1, 2, 2), p=(1, 3, 3)):
    x = x.astype(jnp.float32)
    c2 = params["w3"].shape[0]
    x5 = x[:, None]  # [B, 1, c3, H, W]
    y = lax.conv_general_dilated(
        x5, params["w3"], window_strides=s,
        padding=((p[0], p[0]), (p[1], p[1]), (p[2], p[2])),
        dimension_numbers=("NCDHW", "OIDHW", "NCDHW"))
    scale3 = params["g3"] / jnp.sqrt(params["v3"] + EPS)
    shift3 = params["b3"] - params["m3"] * scale3
    y = jnp.maximum(y * scale3[None, :, None, None, None]
                    + shift3[None, :, None, None, None], 0.0)
    z = lax.conv_general_dilated(
        y, params["wf"], window_strides=(1, 1, 1),
        padding=((0, 0), (0, 0), (0, 0)),
        dimension_numbers=("NCDHW", "OIDHW", "NCDHW"),
        feature_group_count=c2)
    z = z[:, :, 0]  # squeeze depth
    scale2 = params["g2"] / jnp.sqrt(params["v2"] + EPS)
    shift2 = params["b2"] - params["m2"] * scale2
    z = jnp.maximum(z * scale2[None, :, None, None]
                    + shift2[None, :, None, None], 0.0)
    return z


def init_params(key, c1, c2, c3, k=(3, 7, 7), s=(1, 2, 2), p=(1, 3, 3)):
    assert c1 == 1 and c3 > 1
    D_out = math.floor((c3 + 2 * p[0] - (k[0] - 1) - 1) / s[0]) + 1
    ks = jax.random.split(key, 10)
    params = {
        "w3": 0.1 * jax.random.normal(ks[0], (c2, c1, *k), jnp.float32),
        "wf": 0.1 * jax.random.normal(ks[1], (c2, 1, D_out, 1, 1), jnp.float32),
        # BN3d (eval-mode affine + running stats)
        "g3": 1.0 + 0.1 * jax.random.normal(ks[2], (c2,), jnp.float32),
        "b3": 0.1 * jax.random.normal(ks[3], (c2,), jnp.float32),
        "m3": 0.1 * jax.random.normal(ks[4], (c2,), jnp.float32),
        "v3": 0.5 + jnp.abs(jax.random.normal(ks[5], (c2,), jnp.float32)),
        # BN2d
        "g2": 1.0 + 0.1 * jax.random.normal(ks[6], (c2,), jnp.float32),
        "b2": 0.1 * jax.random.normal(ks[7], (c2,), jnp.float32),
        "m2": 0.1 * jax.random.normal(ks[8], (c2,), jnp.float32),
        "v2": 0.5 + jnp.abs(jax.random.normal(ks[9], (c2,), jnp.float32)),
    }
    return params


if __name__ == "__main__":
    # Small shapes consistent with the module defaults: c1=1, c3=8, c2=32.
    B, c1, c2, c3, H, W = 2, 1, 32, 8, 16, 16
    key = jax.random.PRNGKey(0)
    kx, kp = jax.random.split(key)
    x = jax.random.normal(kx, (B, c3, H, W), jnp.float32)  # [B, c3, H, W] (c1=1)
    params = init_params(kp, c1, c2, c3)

    out = convmsi_forward(x, params)
    out = jax.block_until_ready(out)

    ref = convmsi_reference(x, params)
    assert out.shape == (B, c2, 8, 8), out.shape
    out_f32 = out.astype(jnp.float32)
    max_err = float(jnp.max(jnp.abs(out_f32 - ref)))
    # bf16 inputs / weights (BN3d scale folded into W1) with f32 accumulation
    # over an up-to-147-term contraction: use a bf16-appropriate tolerance.
    assert jnp.allclose(out_f32, ref, rtol=5e-2, atol=3e-2), max_err

    print("KERNEL_OK")
</pallas_src>

<mosaic_0001>
module attributes {stable_mosaic.version = 11 : i64} {
  func.func @convmsi_kernel(%arg0: i32, %arg1: i32, %arg2: memref<1x400x128xbf16, #tpu.memory_space<vmem>>, %arg3: memref<256x400xbf16, #tpu.memory_space<vmem>>, %arg4: memref<32x1xf32, #tpu.memory_space<vmem>>, %arg5: memref<256x1xf32, #tpu.memory_space<vmem>>, %arg6: memref<32x1xf32, #tpu.memory_space<vmem>>, %arg7: memref<1x32x128xf32, #tpu.memory_space<vmem>>) attributes {dimension_semantics = [#tpu.dimension_semantics<parallel>, #tpu.dimension_semantics<parallel>], iteration_bounds = array<i64: 2, 1>, scalar_prefetch = 0 : i64, scratch_operands = 0 : i64, tpu.core_type = #tpu.core_type<tc>, window_params = [{transform_indices = @transform_0, window_bounds = array<i64: 1, 400, 128>}, {pipeline_mode = #tpu.pipeline_mode<synchronous>, transform_indices = @transform_1, window_bounds = array<i64: 256, 400>}, {pipeline_mode = #tpu.pipeline_mode<synchronous>, transform_indices = @transform_2, window_bounds = array<i64: 32, 1>}, {pipeline_mode = #tpu.pipeline_mode<synchronous>, transform_indices = @transform_3, window_bounds = array<i64: 256, 1>}, {pipeline_mode = #tpu.pipeline_mode<synchronous>, transform_indices = @transform_4, window_bounds = array<i64: 32, 1>}, {transform_indices = @transform_5, window_bounds = array<i64: 1, 32, 128>}]} {
    %c0 = arith.constant 0 : index
    %c0_0 = arith.constant 0 : index
    %0 = vector.load %arg3[%c0, %c0_0] : memref<256x400xbf16, #tpu.memory_space<vmem>>, vector<256x400xbf16>
    %c0_1 = arith.constant 0 : index
    %c0_2 = arith.constant 0 : index
    %c0_3 = arith.constant 0 : index
    %1 = vector.load %arg2[%c0_1, %c0_2, %c0_3] : memref<1x400x128xbf16, #tpu.memory_space<vmem>>, vector<1x400x128xbf16>
    %2 = vector.shape_cast %1 : vector<1x400x128xbf16> to vector<400x128xbf16>
    %cst = arith.constant dense<0.000000e+00> : vector<256x128xf32>
    %3 = tpu.matmul %0, %2, %cst {dimension_numbers = #tpu.dot_dimension_numbers<[1], [0], [0], [1], [0, 0, 1, 1], [], []>} : vector<256x400xbf16>, vector<400x128xbf16>, vector<256x128xf32> -> vector<256x128xf32>
    %c0_4 = arith.constant 0 : index
    %c0_5 = arith.constant 0 : index
    %4 = vector.load %arg4[%c0_4, %c0_5] : memref<32x1xf32, #tpu.memory_space<vmem>>, vector<32x1xf32>
    %c0_6 = arith.constant 0 : index
    %c0_7 = arith.constant 0 : index
    %5 = vector.load %arg5[%c0_6, %c0_7] : memref<256x1xf32, #tpu.memory_space<vmem>>, vector<256x1xf32>
    %6 = vector.extract_strided_slice %3 {offsets = [0, 0], sizes = [32, 128], strides = [1, 1]} : vector<256x128xf32> to vector<32x128xf32>
    %7 = vector.broadcast %4 : vector<32x1xf32> to vector<32x128xf32>
    %8 = arith.addf %6, %7 : vector<32x128xf32>
    %cst_8 = arith.constant 0.000000e+00 : f32
    %9 = vector.broadcast %cst_8 : f32 to vector<32x128xf32>
    %10 = arith.maximumf %8, %9 : vector<32x128xf32>
    %11 = vector.extract_strided_slice %5 {offsets = [0, 0], sizes = [32, 1], strides = [1, 1]} : vector<256x1xf32> to vector<32x1xf32>
    %12 = vector.broadcast %11 : vector<32x1xf32> to vector<32x128xf32>
    %13 = arith.mulf %10, %12 : vector<32x128xf32>
    %14 = vector.extract_strided_slice %3 {offsets = [32, 0], sizes = [32, 128], strides = [1, 1]} : vector<256x128xf32> to vector<32x128xf32>
    %15 = vector.broadcast %4 : vector<32x1xf32> to vector<32x128xf32>
    %16 = arith.addf %14, %15 : vector<32x128xf32>
    %cst_9 = arith.constant 0.000000e+00 : f32
    %17 = vector.broadcast %cst_9 : f32 to vector<32x128xf32>
    %18 = arith.maximumf %16, %17 : vector<32x128xf32>
    %19 = vector.extract_strided_slice %5 {offsets = [32, 0], sizes = [32, 1], strides = [1, 1]} : vector<256x1xf32> to vector<32x1xf32>
    %20 = vector.broadcast %19 : vector<32x1xf32> to vector<32x128xf32>
    %21 = arith.mulf %18, %20 : vector<32x128xf32>
    %22 = arith.addf %13, %21 : vector<32x128xf32>
    %23 = vector.extract_strided_slice %3 {offsets = [64, 0], sizes = [32, 128], strides = [1, 1]} : vector<256x128xf32> to vector<32x128xf32>
    %24 = vector.broadcast %4 : vector<32x1xf32> to vector<32x128xf32>
    %25 = arith.addf %23, %24 : vector<32x128xf32>
    %cst_10 = arith.constant 0.000000e+00 : f32
    %26 = vector.broadcast %cst_10 : f32 to vector<32x128xf32>
    %27 = arith.maximumf %25, %26 : vector<32x128xf32>
    %28 = vector.extract_strided_slice %5 {offsets = [64, 0], sizes = [32, 1], strides = [1, 1]} : vector<256x1xf32> to vector<32x1xf32>
    %29 = vector.broadcast %28 : vector<32x1xf32> to vector<32x128xf32>
    %30 = arith.mulf %27, %29 : vector<32x128xf32>
    %31 = arith.addf %22, %30 : vector<32x128xf32>
    %32 = vector.extract_strided_slice %3 {offsets = [96, 0], sizes = [32, 128], strides = [1, 1]} : vector<256x128xf32> to vector<32x128xf32>
    %33 = vector.broadcast %4 : vector<32x1xf32> to vector<32x128xf32>
    %34 = arith.addf %32, %33 : vector<32x128xf32>
    %cst_11 = arith.constant 0.000000e+00 : f32
    %35 = vector.broadcast %cst_11 : f32 to vector<32x128xf32>
    %36 = arith.maximumf %34, %35 : vector<32x128xf32>
    %37 = vector.extract_strided_slice %5 {offsets = [96, 0], sizes = [32, 1], strides = [1, 1]} : vector<256x1xf32> to vector<32x1xf32>
    %38 = vector.broadcast %37 : vector<32x1xf32> to vector<32x128xf32>
    %39 = arith.mulf %36, %38 : vector<32x128xf32>
    %40 = arith.addf %31, %39 : vector<32x128xf32>
    %41 = vector.extract_strided_slice %3 {offsets = [128, 0], sizes = [32, 128], strides = [1, 1]} : vector<256x128xf32> to vector<32x128xf32>
    %42 = vector.broadcast %4 : vector<32x1xf32> to vector<32x128xf32>
    %43 = arith.addf %41, %42 : vector<32x128xf32>
    %cst_12 = arith.constant 0.000000e+00 : f32
    %44 = vector.broadcast %cst_12 : f32 to vector<32x128xf32>
    %45 = arith.maximumf %43, %44 : vector<32x128xf32>
    %46 = vector.extract_strided_slice %5 {offsets = [128, 0], sizes = [32, 1], strides = [1, 1]} : vector<256x1xf32> to vector<32x1xf32>
    %47 = vector.broadcast %46 : vector<32x1xf32> to vector<32x128xf32>
    %48 = arith.mulf %45, %47 : vector<32x128xf32>
    %49 = arith.addf %40, %48 : vector<32x128xf32>
    %50 = vector.extract_strided_slice %3 {offsets = [160, 0], sizes = [32, 128], strides = [1, 1]} : vector<256x128xf32> to vector<32x128xf32>
    %51 = vector.broadcast %4 : vector<32x1xf32> to vector<32x128xf32>
    %52 = arith.addf %50, %51 : vector<32x128xf32>
    %cst_13 = arith.constant 0.000000e+00 : f32
    %53 = vector.broadcast %cst_13 : f32 to vector<32x128xf32>
    %54 = arith.maximumf %52, %53 : vector<32x128xf32>
    %55 = vector.extract_strided_slice %5 {offsets = [160, 0], sizes = [32, 1], strides = [1, 1]} : vector<256x1xf32> to vector<32x1xf32>
    %56 = vector.broadcast %55 : vector<32x1xf32> to vector<32x128xf32>
    %57 = arith.mulf %54, %56 : vector<32x128xf32>
    %58 = arith.addf %49, %57 : vector<32x128xf32>
    %59 = vector.extract_strided_slice %3 {offsets = [192, 0], sizes = [32, 128], strides = [1, 1]} : vector<256x128xf32> to vector<32x128xf32>
    %60 = vector.broadcast %4 : vector<32x1xf32> to vector<32x128xf32>
    %61 = arith.addf %59, %60 : vector<32x128xf32>
    %cst_14 = arith.constant 0.000000e+00 : f32
    %62 = vector.broadcast %cst_14 : f32 to vector<32x128xf32>
    %63 = arith.maximumf %61, %62 : vector<32x128xf32>
    %64 = vector.extract_strided_slice %5 {offsets = [192, 0], sizes = [32, 1], strides = [1, 1]} : vector<256x1xf32> to vector<32x1xf32>
    %65 = vector.broadcast %64 : vector<32x1xf32> to vector<32x128xf32>
    %66 = arith.mulf %63, %65 : vector<32x128xf32>
    %67 = arith.addf %58, %66 : vector<32x128xf32>
    %68 = vector.extract_strided_slice %3 {offsets = [224, 0], sizes = [32, 128], strides = [1, 1]} : vector<256x128xf32> to vector<32x128xf32>
    %69 = vector.broadcast %4 : vector<32x1xf32> to vector<32x128xf32>
    %70 = arith.addf %68, %69 : vector<32x128xf32>
    %cst_15 = arith.constant 0.000000e+00 : f32
    %71 = vector.broadcast %cst_15 : f32 to vector<32x128xf32>
    %72 = arith.maximumf %70, %71 : vector<32x128xf32>
    %73 = vector.extract_strided_slice %5 {offsets = [224, 0], sizes = [32, 1], strides = [1, 1]} : vector<256x1xf32> to vector<32x1xf32>
    %74 = vector.broadcast %73 : vector<32x1xf32> to vector<32x128xf32>
    %75 = arith.mulf %72, %74 : vector<32x128xf32>
    %76 = arith.addf %67, %75 : vector<32x128xf32>
    %c0_16 = arith.constant 0 : index
    %c0_17 = arith.constant 0 : index
    %77 = vector.load %arg6[%c0_16, %c0_17] : memref<32x1xf32, #tpu.memory_space<vmem>>, vector<32x1xf32>
    %78 = vector.broadcast %77 : vector<32x1xf32> to vector<32x128xf32>
    %79 = arith.addf %76, %78 : vector<32x128xf32>
    %cst_18 = arith.constant 0.000000e+00 : f32
    %80 = vector.broadcast %cst_18 : f32 to vector<32x128xf32>
    %81 = arith.maximumf %79, %80 : vector<32x128xf32>
    %c0_19 = arith.constant 0 : index
    %c0_20 = arith.constant 0 : index
    %c0_21 = arith.constant 0 : index
    %82 = vector.load %arg7[%c0_19, %c0_20, %c0_21] : memref<1x32x128xf32, #tpu.memory_space<vmem>>, vector<1x32x128xf32>
    %83 = vector.shape_cast %82 : vector<1x32x128xf32> to vector<32x128xf32>
    %84 = vector.shape_cast %81 : vector<32x128xf32> to vector<1x32x128xf32>
    tpu.vector_store %arg7[%c0_19, %c0_20, %c0_21], %84 {strides = array<i32>} : memref<1x32x128xf32, #tpu.memory_space<vmem>>, vector<1x32x128xf32>,
    return
  }
  func.func @transform_0(%arg0: i32, %arg1: i32) -> (i32, i32, i32) {
    %c0_i32 = arith.constant 0 : i32
    %c0_i32_0 = arith.constant 0 : i32
    return %arg0, %c0_i32, %arg1 : i32, i32, i32
  }
  func.func @transform_1(%arg0: i32, %arg1: i32) -> (i32, i32) {
    %c0_i32 = arith.constant 0 : i32
    %c0_i32_0 = arith.constant 0 : i32
    %c0_i32_1 = arith.constant 0 : i32
    return %c0_i32, %c0_i32_0 : i32, i32
  }
  func.func @transform_2(%arg0: i32, %arg1: i32) -> (i32, i32) {
    %c0_i32 = arith.constant 0 : i32
    %c0_i32_0 = arith.constant 0 : i32
    %c0_i32_1 = arith.constant 0 : i32
    return %c0_i32, %c0_i32_0 : i32, i32
  }
  func.func @transform_3(%arg0: i32, %arg1: i32) -> (i32, i32) {
    %c0_i32 = arith.constant 0 : i32
    %c0_i32_0 = arith.constant 0 : i32
    %c0_i32_1 = arith.constant 0 : i32
    return %c0_i32, %c0_i32_0 : i32, i32
  }
  func.func @transform_4(%arg0: i32, %arg1: i32) -> (i32, i32) {
    %c0_i32 = arith.constant 0 : i32
    %c0_i32_0 = arith.constant 0 : i32
    %c0_i32_1 = arith.constant 0 : i32
    return %c0_i32, %c0_i32_0 : i32, i32
  }
  func.func @transform_5(%arg0: i32, %arg1: i32) -> (i32, i32, i32) {
    %c0_i32 = arith.constant 0 : i32
    %c0_i32_0 = arith.constant 0 : i32
    return %arg0, %c0_i32, %arg1 : i32, i32, i32
  }
}

</mosaic_0001>

<llo_original>
// kernel: tpu_custom_call.1
$region0: #{tpu_custom_call.1}
  #allocation0 [shape = 'u32[]', space=smem, size = 0x4, offset = 0x4, fixed_abs, tag = 'smem constant byte address 0x4 - core index']
  #allocation1 [shape = 'u32[144,128]{1,0:T(1,128)}', space=vmem, size = 0x12000, scoped, tag = 'internal scratch']
  %s0 = inlined_call_operand.vmem [shape: bf16[2,400,128], index: 0, kind: input, shape index: {}]
  %s1 = inlined_call_operand.vmem [shape: bf16[256,400], index: 1, kind: input, shape index: {}]
  %s2 = inlined_call_operand.vmem [shape: f32[32,1], index: 2, kind: input, shape index: {}]
  %s3 = inlined_call_operand.vmem [shape: f32[256,1], index: 3, kind: input, shape index: {}]
  %s4 = inlined_call_operand.vmem [shape: f32[32,1], index: 4, kind: input, shape index: {}]
  %s5 = inlined_call_operand.hbm [shape: f32[2,32,128], index: 5, kind: output, shape index: {}]
  %s6 = sld [smem:[#allocation0]]
  $region53: #{tpu_custom_call.1} parent=0
    _
  %s8 = ssub.s32 1, %s6
  %s9 = scalar_select 0, %s8, %s6
  $region1: #{tpu_custom_call.1} parent=0
    #allocation2 [shape = 'u8[32768]{0}', space=vmem, size = 0x8000, scoped, tag = 'output window, operand 0']
    #allocation3 [shape = 's32[2]{0}', space=sflag, size = 0x8, scoped, tag = 'scoped memory for tpu_custom_call.1']
    %10 = vsyncpa [#allocation3], 0
    %s11 = scalar_lea.sflag [#allocation3], 1
    %12 = vsyncpa %s11, 0
    loop: start=0, step=1, limit=4
    $region2: #{tpu_custom_call.1} parent=1 // loop_pre_header
      _
    $region3: #{tpu_custom_call.1} parent=1 // loop_header
      %s14 = sphi 0, %s18
      %p15 = scmp.ge.s32.totalorder %s14, 4
      %s21 = sphi 0, %s33
      %s22 = sphi 0, %s29
      %s23 = sphi 0, %s21
      %s24 = sphi 0, %s22
      %s25 = sphi 0, %s23
      %s26 = sphi 0, %s24
      %s38 = sphi 0, %s40
      %s41 = sphi 0, %s38
      %s42 = sphi 0, %s41
      %s58 = sphi 0, %s42
      %s62 = sphi 0, %s62
      %s64 = sphi 0, %s62
      %s65 = sphi 0, %s64
      %s79 = sphi 0, %s65
      %s83 = sphi 0, %s83
      %s85 = sphi 0, %s83
      %s86 = sphi 0, %s85
      %s100 = sphi 0, %s86
      %s104 = sphi 0, %s104
      %s106 = sphi 0, %s104
      %s107 = sphi 0, %s106
      %s121 = sphi 0, %s107
      %s125 = sphi 0, %s125
      %s127 = sphi 0, %s125
      %s128 = sphi 0, %s127
      %s142 = sphi 0, %s128
      %s150 = sphi 0, %s152
      %s153 = sphi 0, %s150
      %s154 = sphi 0, %s153
      %s170 = sphi 0, %s154
    $region4: #{tpu_custom_call.1} parent=1 // loop_header_branch
      %17 = sbr.rel (%p15) target = $region8
    $region5: #{tpu_custom_call.1} parent=1 // loop_body
      %s19 = ssub.s32 %s14, 1
      %s20 = ssub.s32 %s14, 2
      %s27 = sadd.s32 1, %s22
      %p28 = scmp.ge.s32.totalorder %s27, 1
      %s29 = scalar_select %p28, 0, %s27
      %s30 = sadd.s32 1, %s21
      %s31 = scalar_select %p28, %s30, %s21
      %p32 = scmp.ge.s32.totalorder %s31, 2
      %s33 = scalar_select %p32, 0, %s31
      %s34 = ssub.s32 %s21, %s33
      %s35 = ssub.s32 %s22, %s29
      %s36 = sor.u32 %s34, %s35
      %p37 = scmp.eq.s32.totalorder %s36, 0
      %s39 = sadd.s32 %s38, 1
      %s40 = scalar_select %p37, %s38, %s39
      %p43 = pneg %p37
      %p44 = scmp.eq.s32.totalorder %s14, 1
      %p45 = por %p43, %p44
      %p46 = scmp.ne.s32.totalorder %s38, %s41
      %p47 = scmp.eq.s32.totalorder %s14, 0
      %p48 = por %p46, %p47
      %p49 = scmp.ne.s32.totalorder %s38, %s41
      %p50 = scmp.eq.s32.totalorder %s19, 1
      %p51 = por %p49, %p50
      %p52 = scmp.ne.s32.totalorder %s41, %s42
      %p53 = scmp.eq.s32.totalorder %s19, 0
      %p54 = por %p52, %p53
      %p55 = scmp.ne.s32.totalorder %s41, %s42
      %p56 = scmp.eq.s32.totalorder %s20, 1
      %p57 = por %p55, %p56
      %p59 = scmp.ne.s32.totalorder %s42, %s58
      %p60 = scmp.eq.s32.totalorder %s20, 0
      %p61 = por %p59, %p60
      %s63 = sadd.s32 %s62, 1
      %p66 = scmp.eq.s32.totalorder %s14, 1
      %p67 = scmp.ne.s32.totalorder %s62, %s64
      %p68 = scmp.eq.s32.totalorder %s14, 0
      %p69 = por %p67, %p68
      %p70 = scmp.ne.s32.totalorder %s62, %s64
      %p71 = scmp.eq.s32.totalorder %s19, 1
      %p72 = por %p70, %p71
      %p73 = scmp.ne.s32.totalorder %s64, %s65
      %p74 = scmp.eq.s32.totalorder %s19, 0
      %p75 = por %p73, %p74
      %p76 = scmp.ne.s32.totalorder %s64, %s65
      %p77 = scmp.eq.s32.totalorder %s20, 1
      %p78 = por %p76, %p77
      %p80 = scmp.ne.s32.totalorder %s65, %s79
      %p81 = scmp.eq.s32.totalorder %s20, 0
      %p82 = por %p80, %p81
      %s84 = sadd.s32 %s83, 1
      %p87 = scmp.eq.s32.totalorder %s14, 1
      %p88 = scmp.ne.s32.totalorder %s83, %s85
      %p89 = scmp.eq.s32.totalorder %s14, 0
      %p90 = por %p88, %p89
      %p91 = scmp.ne.s32.totalorder %s83, %s85
      %p92 = scmp.eq.s32.totalorder %s19, 1
      %p93 = por %p91, %p92
      %p94 = scmp.ne.s32.totalorder %s85, %s86
      %p95 = scmp.eq.s32.totalorder %s19, 0
      %p96 = por %p94, %p95
      %p97 = scmp.ne.s32.totalorder %s85, %s86
      %p98 = scmp.eq.s32.totalorder %s20, 1
      %p99 = por %p97, %p98
      %p101 = scmp.ne.s32.totalorder %s86, %s100
      %p102 = scmp.eq.s32.totalorder %s20, 0
      %p103 = por %p101, %p102
      %s105 = sadd.s32 %s104, 1
      %p108 = scmp.eq.s32.totalorder %s14, 1
      %p109 = scmp.ne.s32.totalorder %s104, %s106
      %p110 = scmp.eq.s32.totalorder %s14, 0
      %p111 = por %p109, %p110
      %p112 = scmp.ne.s32.totalorder %s104, %s106
      %p113 = scmp.eq.s32.totalorder %s19, 1
      %p114 = por %p112, %p113
      %p115 = scmp.ne.s32.totalorder %s106, %s107
      %p116 = scmp.eq.s32.totalorder %s19, 0
      %p117 = por %p115, %p116
      %p118 = scmp.ne.s32.totalorder %s106, %s107
      %p119 = scmp.eq.s32.totalorder %s20, 1
      %p120 = por %p118, %p119
      %p122 = scmp.ne.s32.totalorder %s107, %s121
      %p123 = scmp.eq.s32.totalorder %s20, 0
      %p124 = por %p122, %p123
      %s126 = sadd.s32 %s125, 1
      %p129 = scmp.eq.s32.totalorder %s14, 1
      %p130 = scmp.ne.s32.totalorder %s125, %s127
      %p131 = scmp.eq.s32.totalorder %s14, 0
      %p132 = por %p130, %p131
      %p133 = scmp.ne.s32.totalorder %s125, %s127
      %p134 = scmp.eq.s32.totalorder %s19, 1
      %p135 = por %p133, %p134
      %p136 = scmp.ne.s32.totalorder %s127, %s128
      %p137 = scmp.eq.s32.totalorder %s19, 0
      %p138 = por %p136, %p137
      %p139 = scmp.ne.s32.totalorder %s127, %s128
      %p140 = scmp.eq.s32.totalorder %s20, 1
      %p141 = por %p139, %p140
      %p143 = scmp.ne.s32.totalorder %s128, %s142
      %p144 = scmp.eq.s32.totalorder %s20, 0
      %p145 = por %p143, %p144
      %s146 = ssub.s32 %s21, %s33
      %s147 = ssub.s32 %s22, %s29
      %s148 = sor.u32 %s146, %s147
      %p149 = scmp.eq.s32.totalorder %s148, 0
      %s151 = sadd.s32 %s150, 1
      %s152 = scalar_select %p149, %s150, %s151
      %p155 = pneg %p149
      %p156 = scmp.eq.s32.totalorder %s14, 1
      %p157 = por %p155, %p156
      %p158 = scmp.ne.s32.totalorder %s150, %s153
      %p159 = scmp.eq.s32.totalorder %s14, 0
      %p160 = por %p158, %p159
      %p161 = scmp.ne.s32.totalorder %s150, %s153
      %p162 = scmp.eq.s32.totalorder %s19, 1
      %p163 = por %p161, %p162
      %p164 = scmp.ne.s32.totalorder %s153, %s154
      %p165 = scmp.eq.s32.totalorder %s19, 0
      %p166 = por %p164, %p165
      %p167 = scmp.ne.s32.totalorder %s153, %s154
      %p168 = scmp.eq.s32.totalorder %s20, 1
      %p169 = por %p167, %p168
      %p171 = scmp.ne.s32.totalorder %s154, %s170
      %p172 = scmp.eq.s32.totalorder %s20, 0
      %p173 = por %p171, %p172
      %p174 = scmp.le.s32.totalorder 1, %s14
      %p175 = scmp.lt.s32.totalorder %s14, 3
      %p176 = pnand %p174, %p175
      %p177 = pneg %p176
      // Predicated region
      $region9: #{tpu_custom_call.1} parent=5 // pred_check
        _
      $region10: #{tpu_custom_call.1} parent=5 // pred_check_branch
        %179 = sbr.rel (%p176) target = $region12
      $region11: #{tpu_custom_call.1} parent=5 // pred_region
        %s180 = ssub.s32 %s14, 1
        // Predicated region
        $region13: #{tpu_custom_call.1} parent=11 // pred_check
          %p181 = pneg %p75
        $region14: #{tpu_custom_call.1} parent=11 // pred_check_branch
          %183 = sbr.rel (%p181) target = $region16
        $region15: #{tpu_custom_call.1} parent=11 // pred_region
          _
        $region16: #{tpu_custom_call.1} parent=11 // pred_fallthru
          _
        // Predicated region
        $region17: #{tpu_custom_call.1} parent=11 // pred_check
          %p184 = pneg %p96
        $region18: #{tpu_custom_call.1} parent=11 // pred_check_branch
          %186 = sbr.rel (%p184) target = $region20
        $region19: #{tpu_custom_call.1} parent=11 // pred_region
          _
        $region20: #{tpu_custom_call.1} parent=11 // pred_fallthru
          _
        // Predicated region
        $region21: #{tpu_custom_call.1} parent=11 // pred_check
          %p187 = pneg %p117
        $region22: #{tpu_custom_call.1} parent=11 // pred_check_branch
          %189 = sbr.rel (%p187) target = $region24
        $region23: #{tpu_custom_call.1} parent=11 // pred_region
          _
        $region24: #{tpu_custom_call.1} parent=11 // pred_fallthru
          _
        // Predicated region
        $region25: #{tpu_custom_call.1} parent=11 // pred_check
          %p190 = pneg %p138
        $region26: #{tpu_custom_call.1} parent=11 // pred_check_branch
          %192 = sbr.rel (%p190) target = $region28
        $region27: #{tpu_custom_call.1} parent=11 // pred_region
          _
        $region28: #{tpu_custom_call.1} parent=11 // pred_fallthru
          _
      $region12: #{tpu_custom_call.1} parent=5 // pred_fallthru
        _
      %p193 = scmp.lt.s32.totalorder %s14, 2
      // Predicated region
      $region29: #{tpu_custom_call.1} parent=5 // pred_check
        %p194 = pneg %p193
      $region30: #{tpu_custom_call.1} parent=5 // pred_check_branch
        %196 = sbr.rel (%p194) target = $region32
      $region31: #{tpu_custom_call.1} parent=5 // pred_region
        // Predicated region
        $region33: #{tpu_custom_call.1} parent=31 // pred_check
          %p197 = pneg %p48
        $region34: #{tpu_custom_call.1} parent=31 // pred_check_branch
          %199 = sbr.rel (%p197) target = $region36
        $region35: #{tpu_custom_call.1} parent=31 // pred_region
          %p200 = scmp.lt.s32.totalorder %s21, 1
          %s201 = scalar_select %p200, %s21, 1
          %p202 = scmp.lt.s32.totalorder %s22, 0
          %s203 = scalar_select %p202, %s22, 0
          %s204 = smul.addr %s201, 50
          %s205 = sadd.s32 %s203, %s204
          %s206 = smul.addr %s205, 4
          %s207 = scalar_lea.vmem %s0, %s206
        $region36: #{tpu_custom_call.1} parent=31 // pred_fallthru
          _
      $region32: #{tpu_custom_call.1} parent=5 // pred_fallthru
        _
      %p208 = scmp.le.s32.totalorder 1, %s14
      %p209 = scmp.lt.s32.totalorder %s14, 3
      %p210 = pnand %p208, %p209
      %p211 = pneg %p210
      // Predicated region
      $region37: #{tpu_custom_call.1} parent=5 // pred_check
        _
      $region38: #{tpu_custom_call.1} parent=5 // pred_check_branch
        %213 = sbr.rel (%p210) target = $region40
      $region39: #{tpu_custom_call.1} parent=5 // pred_region
        %s214 = ssub.s32 %s14, 1
        %p215 = scmp.lt.s32.totalorder %s23, 1
        %s216 = scalar_select %p215, %s23, 1
        %p217 = scmp.lt.s32.totalorder %s24, 0
        %s218 = scalar_select %p217, %s24, 0
        %s219 = smul.addr %s216, 50
        %s220 = sadd.s32 %s218, %s219
        %s221 = smul.addr %s220, 4
        %s222 = scalar_lea.vmem %s0, %s221
        %p223 = pneg %p54
        %p224 = pneg %p51
        %p225 = pneg %p75
        %p226 = pneg %p72
        %p227 = pneg %p96
        %p228 = pneg %p93
        %p229 = pneg %p117
        %p230 = pneg %p114
        %p231 = pneg %p138
        %p232 = pneg %p135
        %p233 = pneg %p166
        %p234 = pneg %p163
        %s235 = sand.u32 %s153, 1
        %s236 = scalar_lea.sflag [#allocation3], %s235
        %s237 = sand.u32 %s153, 1
        %s238 = smul.addr %s237, 32
        %s239 = scalar_lea.vmem [#allocation2], %s238
        %p240 = scmp.lt.s32.totalorder %s23, 1
        %s241 = scalar_select %p240, %s23, 1
        %p242 = scmp.lt.s32.totalorder %s24, 0
        %s243 = scalar_select %p242, %s24, 0
        %s244 = smul.addr %s241, 50
        %s245 = sadd.s32 %s243, %s244
        %s246 = smul.addr %s245, 4
        %s247 = scalar_lea.vmem %s0, %s246
        %v249 = vld [vmem:[%s1] sm:$0xff]
        %v250 = vld [vmem:[%s1 + $0x8] sm:$0xff]
        %v251 = vld [vmem:[%s1 + $0x10] sm:$0xff]
        %v252 = vld [vmem:[%s1 + $0x18] sm:$0xff]
        %v253 = vld [vmem:[%s1 + $0x20] sm:$0xff]
        %v254 = vld [vmem:[%s1 + $0x28] sm:$0xff]
        %v255 = vld [vmem:[%s1 + $0x30] sm:$0xff]
        %v256 = vld [vmem:[%s1 + $0x38] sm:$0xff]
        %v257 = vld [vmem:[%s1 + $0x40] sm:$0xff]
        %v258 = vld [vmem:[%s1 + $0x48] sm:$0xff]
        %v259 = vld [vmem:[%s1 + $0x50] sm:$0xff]
        %v260 = vld [vmem:[%s1 + $0x58] sm:$0xff]
        %v261 = vld [vmem:[%s1 + $0x60] sm:$0xff]
        %v262 = vld [vmem:[%s1 + $0x68] sm:$0xff]
        %v263 = vld [vmem:[%s1 + $0x70] sm:$0xff]
        %v264 = vld [vmem:[%s1 + $0x78] sm:$0xff]
        %v265 = vld [vmem:[%s1 + $0x80] sm:$0xff]
        %v266 = vld [vmem:[%s1 + $0x88] sm:$0xff]
        %v267 = vld [vmem:[%s1 + $0x90] sm:$0xff]
        %v268 = vld [vmem:[%s1 + $0x98] sm:$0xff]
        %v269 = vld [vmem:[%s1 + $0xa0] sm:$0xff]
        %v270 = vld [vmem:[%s1 + $0xa8] sm:$0xff]
        %v271 = vld [vmem:[%s1 + $0xb0] sm:$0xff]
        %v272 = vld [vmem:[%s1 + $0xb8] sm:$0xff]
        %v273 = vld [vmem:[%s1 + $0xc0] sm:$0xff]
        %v274 = vld [vmem:[%s1 + $0xc8] sm:$0xff]
        %v275 = vld [vmem:[%s1 + $0xd0] sm:$0xff]
        %v276 = vld [vmem:[%s1 + $0xd8] sm:$0xff]
        %v277 = vld [vmem:[%s1 + $0xe0] sm:$0xff]
        %v278 = vld [vmem:[%s1 + $0xe8] sm:$0xff]
        %v279 = vld [vmem:[%s1 + $0xf0] sm:$0xff]
        %v280 = vld [vmem:[%s1 + $0xf8] sm:$0xff]
        %v281 = vld [vmem:[%s1 + $0x100] sm:$0xff]
        %v282 = vld [vmem:[%s1 + $0x108] sm:$0xff]
        %v283 = vld [vmem:[%s1 + $0x110] sm:$0xff]
        %v284 = vld [vmem:[%s1 + $0x118] sm:$0xff]
        %v285 = vld [vmem:[%s1 + $0x120] sm:$0xff]
        %v286 = vld [vmem:[%s1 + $0x128] sm:$0xff]
        %v287 = vld [vmem:[%s1 + $0x130] sm:$0xff]
        %v288 = vld [vmem:[%s1 + $0x138] sm:$0xff]
        %v289 = vld [vmem:[%s1 + $0x140] sm:$0xff]
        %v290 = vld [vmem:[%s1 + $0x148] sm:$0xff]
        %v291 = vld [vmem:[%s1 + $0x150] sm:$0xff]
        %v292 = vld [vmem:[%s1 + $0x158] sm:$0xff]
        %v293 = vld [vmem:[%s1 + $0x160] sm:$0xff]
        %v294 = vld [vmem:[%s1 + $0x168] sm:$0xff]
        %v295 = vld [vmem:[%s1 + $0x170] sm:$0xff]
        %v296 = vld [vmem:[%s1 + $0x178] sm:$0xff]
        %v297 = vld [vmem:[%s1 + $0x180] sm:$0xff]
        %v298 = vld [vmem:[%s1 + $0x188] sm:$0xff]
        %v299 = vld [vmem:[%s1 + $0x190] sm:$0xff]
        %v300 = vld [vmem:[%s1 + $0x198] sm:$0xff]
        %v301 = vld [vmem:[%s1 + $0x1a0] sm:$0xff]
        %v302 = vld [vmem:[%s1 + $0x1a8] sm:$0xff]
        %v303 = vld [vmem:[%s1 + $0x1b0] sm:$0xff]
        %v304 = vld [vmem:[%s1 + $0x1b8] sm:$0xff]
        %v305 = vld [vmem:[%s1 + $0x1c0] sm:$0xff]
        %v306 = vld [vmem:[%s1 + $0x1c8] sm:$0xff]
        %v307 = vld [vmem:[%s1 + $0x1d0] sm:$0xff]
        %v308 = vld [vmem:[%s1 + $0x1d8] sm:$0xff]
        %v309 = vld [vmem:[%s1 + $0x1e0] sm:$0xff]
        %v310 = vld [vmem:[%s1 + $0x1e8] sm:$0xff]
        %v311 = vld [vmem:[%s1 + $0x1f0] sm:$0xff]
        %v312 = vld [vmem:[%s1 + $0x1f8] sm:$0xff]
        %v313 = vld [vmem:[%s247] sm:$0xf]
        %v314 = vld [vmem:[%s247 + $0x4] sm:$0xf]
        %v315 = vld [vmem:[%s247 + $0x8] sm:$0xf]
        %v316 = vld [vmem:[%s247 + $0xc] sm:$0xf]
        %v317 = vld [vmem:[%s247 + $0x10] sm:$0xf]
        %v318 = vld [vmem:[%s247 + $0x14] sm:$0xf]
        %v319 = vld [vmem:[%s247 + $0x18] sm:$0xf]
        %v320 = vld [vmem:[%s247 + $0x1c] sm:$0xf]
        %v321 = vld [vmem:[%s247 + $0x20] sm:$0xf]
        %v322 = vld [vmem:[%s247 + $0x24] sm:$0xf]
        %v323 = vld [vmem:[%s247 + $0x28] sm:$0xf]
        %v324 = vld [vmem:[%s247 + $0x2c] sm:$0xf]
        %v325 = vld [vmem:[%s247 + $0x30] sm:$0xf]
        %v326 = vld [vmem:[%s247 + $0x34] sm:$0xf]
        %v327 = vld [vmem:[%s247 + $0x38] sm:$0xf]
        %v328 = vld [vmem:[%s247 + $0x3c] sm:$0xf]
        %v329 = vld [vmem:[%s247 + $0x40] sm:$0xf]
        %v330 = vld [vmem:[%s247 + $0x44] sm:$0xf]
        %v331 = vld [vmem:[%s247 + $0x48] sm:$0xf]
        %v332 = vld [vmem:[%s247 + $0x4c] sm:$0xf]
        %v333 = vld [vmem:[%s247 + $0x50] sm:$0xf]
        %v334 = vld [vmem:[%s247 + $0x54] sm:$0xf]
        %v335 = vld [vmem:[%s247 + $0x58] sm:$0xf]
        %v336 = vld [vmem:[%s247 + $0x5c] sm:$0xf]
        %v337 = vld [vmem:[%s247 + $0x60] sm:$0xf]
        %v338 = vld [vmem:[%s247 + $0x64] sm:$0xf]
        %v339 = vld [vmem:[%s247 + $0x68] sm:$0xf]
        %v340 = vld [vmem:[%s247 + $0x6c] sm:$0xf]
        %v341 = vld [vmem:[%s247 + $0x70] sm:$0xf]
        %v342 = vld [vmem:[%s247 + $0x74] sm:$0xf]
        %v343 = vld [vmem:[%s247 + $0x78] sm:$0xf]
        %v344 = vld [vmem:[%s247 + $0x7c] sm:$0xf]
        %v345 = vld [vmem:[%s247 + $0x80] sm:$0xf]
        %v346 = vld [vmem:[%s247 + $0x84] sm:$0xf]
        %v347 = vld [vmem:[%s247 + $0x88] sm:$0xf]
        %v348 = vld [vmem:[%s247 + $0x8c] sm:$0xf]
        %v349 = vld [vmem:[%s247 + $0x90] sm:$0xf]
        %v350 = vld [vmem:[%s247 + $0x94] sm:$0xf]
        %v351 = vld [vmem:[%s247 + $0x98] sm:$0xf]
        %v352 = vld [vmem:[%s247 + $0x9c] sm:$0xf]
        %v353 = vld [vmem:[%s247 + $0xa0] sm:$0xf]
        %v354 = vld [vmem:[%s247 + $0xa4] sm:$0xf]
        %v355 = vld [vmem:[%s247 + $0xa8] sm:$0xf]
        %v356 = vld [vmem:[%s247 + $0xac] sm:$0xf]
        %v357 = vld [vmem:[%s247 + $0xb0] sm:$0xf]
        %v358 = vld [vmem:[%s247 + $0xb4] sm:$0xf]
        %v359 = vld [vmem:[%s247 + $0xb8] sm:$0xf]
        %v360 = vld [vmem:[%s247 + $0xbc] sm:$0xf]
        %v361 = vld [vmem:[%s247 + $0xc0] sm:$0xf]
        %v362 = vld [vmem:[%s247 + $0xc4] sm:$0xf]
        %v427 = vunpack.c.l.b16 %v249
        %v428 = vunpack.c.h.b16 %v249
        %v429 = vunpack.c.l.b16 %v250
        %v430 = vunpack.c.h.b16 %v250
        %v431 = vunpack.c.l.b16 %v251
        %v432 = vunpack.c.h.b16 %v251
        %v433 = vunpack.c.l.b16 %v252
        %v434 = vunpack.c.h.b16 %v252
        %v435 = vunpack.c.l.b16 %v253
        %v436 = vunpack.c.h.b16 %v253
        %v437 = vunpack.c.l.b16 %v254
        %v438 = vunpack.c.h.b16 %v254
        %v439 = vunpack.c.l.b16 %v255
        %v440 = vunpack.c.h.b16 %v255
        %v441 = vunpack.c.l.b16 %v256
        %v442 = vunpack.c.h.b16 %v256
        %v443 = vunpack.c.l.b16 %v257
        %v444 = vunpack.c.h.b16 %v257
        %v445 = vunpack.c.l.b16 %v258
        %v446 = vunpack.c.h.b16 %v258
        %v447 = vunpack.c.l.b16 %v259
        %v448 = vunpack.c.h.b16 %v259
        %v449 = vunpack.c.l.b16 %v260
        %v450 = vunpack.c.h.b16 %v260
        %v451 = vunpack.c.l.b16 %v261
        %v452 = vunpack.c.h.b16 %v261
        %v453 = vunpack.c.l.b16 %v262
        %v454 = vunpack.c.h.b16 %v262
        %v455 = vunpack.c.l.b16 %v263
        %v456 = vunpack.c.h.b16 %v263
        %v457 = vunpack.c.l.b16 %v264
        %v458 = vunpack.c.h.b16 %v264
        %v459 = vunpack.c.l.b16 %v265
        %v460 = vunpack.c.h.b16 %v265
        %v461 = vunpack.c.l.b16 %v266
        %v462 = vunpack.c.h.b16 %v266
        %v463 = vunpack.c.l.b16 %v267
        %v464 = vunpack.c.h.b16 %v267
        %v465 = vunpack.c.l.b16 %v268
        %v466 = vunpack.c.h.b16 %v268
        %v467 = vunpack.c.l.b16 %v269
        %v468 = vunpack.c.h.b16 %v269
        %v469 = vunpack.c.l.b16 %v270
        %v470 = vunpack.c.h.b16 %v270
        %v471 = vunpack.c.l.b16 %v271
        %v472 = vunpack.c.h.b16 %v271
        %v473 = vunpack.c.l.b16 %v272
        %v474 = vunpack.c.h.b16 %v272
        %v475 = vunpack.c.l.b16 %v273
        %v476 = vunpack.c.h.b16 %v273
        %v477 = vunpack.c.l.b16 %v274
        %v478 = vunpack.c.h.b16 %v274
        %v479 = vunpack.c.l.b16 %v275
        %v480 = vunpack.c.h.b16 %v275
        %v481 = vunpack.c.l.b16 %v276
        %v482 = vunpack.c.h.b16 %v276
        %v483 = vunpack.c.l.b16 %v277
        %v484 = vunpack.c.h.b16 %v277
        %v485 = vunpack.c.l.b16 %v278
        %v486 = vunpack.c.h.b16 %v278
        %v487 = vunpack.c.l.b16 %v279
        %v488 = vunpack.c.h.b16 %v279
        %v489 = vunpack.c.l.b16 %v280
        %v490 = vunpack.c.h.b16 %v280
        %v491 = vunpack.c.l.b16 %v281
        %v492 = vunpack.c.h.b16 %v281
        %v493 = vunpack.c.l.b16 %v282
        %v494 = vunpack.c.h.b16 %v282
        %v495 = vunpack.c.l.b16 %v283
        %v496 = vunpack.c.h.b16 %v283
        %v497 = vunpack.c.l.b16 %v284
        %v498 = vunpack.c.h.b16 %v284
        %v499 = vunpack.c.l.b16 %v285
        %v500 = vunpack.c.h.b16 %v285
        %v501 = vunpack.c.l.b16 %v286
        %v502 = vunpack.c.h.b16 %v286
        %v503 = vunpack.c.l.b16 %v287
        %v504 = vunpack.c.h.b16 %v287
        %v505 = vunpack.c.l.b16 %v288
        %v506 = vunpack.c.h.b16 %v288
        %v507 = vunpack.c.l.b16 %v289
        %v508 = vunpack.c.h.b16 %v289
        %v509 = vunpack.c.l.b16 %v290
        %v510 = vunpack.c.h.b16 %v290
        %v511 = vunpack.c.l.b16 %v291
        %v512 = vunpack.c.h.b16 %v291
        %v513 = vunpack.c.l.b16 %v292
        %v514 = vunpack.c.h.b16 %v292
        %v515 = vunpack.c.l.b16 %v293
        %v516 = vunpack.c.h.b16 %v293
        %v517 = vunpack.c.l.b16 %v294
        %v518 = vunpack.c.h.b16 %v294
        %v519 = vunpack.c.l.b16 %v295
        %v520 = vunpack.c.h.b16 %v295
        %v521 = vunpack.c.l.b16 %v296
        %v522 = vunpack.c.h.b16 %v296
        %v523 = vunpack.c.l.b16 %v297
        %v524 = vunpack.c.h.b16 %v297
        %v525 = vunpack.c.l.b16 %v298
        %v526 = vunpack.c.h.b16 %v298
        %v527 = vunpack.c.l.b16 %v299
        %v528 = vunpack.c.h.b16 %v299
        %v529 = vunpack.c.l.b16 %v300
        %v530 = vunpack.c.h.b16 %v300
        %v531 = vunpack.c.l.b16 %v301
        %v532 = vunpack.c.h.b16 %v301
        %v533 = vunpack.c.l.b16 %v302
        %v534 = vunpack.c.h.b16 %v302
        %v535 = vunpack.c.l.b16 %v303
        %v536 = vunpack.c.h.b16 %v303
        %v537 = vunpack.c.l.b16 %v304
        %v538 = vunpack.c.h.b16 %v304
        %v539 = vunpack.c.l.b16 %v305
        %v540 = vunpack.c.h.b16 %v305
        %v541 = vunpack.c.l.b16 %v306
        %v542 = vunpack.c.h.b16 %v306
        %v543 = vunpack.c.l.b16 %v307
        %v544 = vunpack.c.h.b16 %v307
        %v545 = vunpack.c.l.b16 %v308
        %v546 = vunpack.c.h.b16 %v308
        %v547 = vunpack.c.l.b16 %v309
        %v548 = vunpack.c.h.b16 %v309
        %v549 = vunpack.c.l.b16 %v310
        %v550 = vunpack.c.h.b16 %v310
        %v551 = vunpack.c.l.b16 %v311
        %v552 = vunpack.c.h.b16 %v311
        %v553 = vunpack.c.l.b16 %v312
        %v554 = vunpack.c.h.b16 %v312
        %v555 = vpack.c.b16 %v431, %v427
        %v556 = vpack.c.b16 %v432, %v428
        %v557 = vpack.c.b16 %v433, %v429
        %v558 = vpack.c.b16 %v434, %v430
        %v559 = vpack.c.b16 %v439, %v435
        %v560 = vpack.c.b16 %v440, %v436
        %v561 = vpack.c.b16 %v441, %v437
        %v562 = vpack.c.b16 %v442, %v438
        %v563 = vpack.c.b16 %v447, %v443
        %v564 = vpack.c.b16 %v448, %v444
        %v565 = vpack.c.b16 %v449, %v445
        %v566 = vpack.c.b16 %v450, %v446
        %v567 = vpack.c.b16 %v455, %v451
        %v568 = vpack.c.b16 %v456, %v452
        %v569 = vpack.c.b16 %v457, %v453
        %v570 = vpack.c.b16 %v458, %v454
        %v571 = vpack.c.b16 %v463, %v459
        %v572 = vpack.c.b16 %v464, %v460
        %v573 = vpack.c.b16 %v465, %v461
        %v574 = vpack.c.b16 %v466, %v462
        %v575 = vpack.c.b16 %v471, %v467
        %v576 = vpack.c.b16 %v472, %v468
        %v577 = vpack.c.b16 %v473, %v469
        %v578 = vpack.c.b16 %v474, %v470
        %v579 = vpack.c.b16 %v479, %v475
        %v580 = vpack.c.b16 %v480, %v476
        %v581 = vpack.c.b16 %v481, %v477
        %v582 = vpack.c.b16 %v482, %v478
        %v583 = vpack.c.b16 %v487, %v483
        %v584 = vpack.c.b16 %v488, %v484
        %v585 = vpack.c.b16 %v489, %v485
        %v586 = vpack.c.b16 %v490, %v486
        %v587 = vpack.c.b16 %v495, %v491
        %v588 = vpack.c.b16 %v496, %v492
        %v589 = vpack.c.b16 %v497, %v493
        %v590 = vpack.c.b16 %v498, %v494
        %v591 = vpack.c.b16 %v503, %v499
        %v592 = vpack.c.b16 %v504, %v500
        %v593 = vpack.c.b16 %v505, %v501
        %v594 = vpack.c.b16 %v506, %v502
        %v595 = vpack.c.b16 %v511, %v507
        %v596 = vpack.c.b16 %v512, %v508
        %v597 = vpack.c.b16 %v513, %v509
        %v598 = vpack.c.b16 %v514, %v510
        %v599 = vpack.c.b16 %v519, %v515
        %v600 = vpack.c.b16 %v520, %v516
        %v601 = vpack.c.b16 %v521, %v517
        %v602 = vpack.c.b16 %v522, %v518
        %v603 = vpack.c.b16 %v527, %v523
        %v604 = vpack.c.b16 %v528, %v524
        %v605 = vpack.c.b16 %v529, %v525
        %v606 = vpack.c.b16 %v530, %v526
        %v607 = vpack.c.b16 %v535, %v531
        %v608 = vpack.c.b16 %v536, %v532
        %v609 = vpack.c.b16 %v537, %v533
        %v610 = vpack.c.b16 %v538, %v534
        %v611 = vpack.c.b16 %v543, %v539
        %v612 = vpack.c.b16 %v544, %v540
        %v613 = vpack.c.b16 %v545, %v541
        %v614 = vpack.c.b16 %v546, %v542
        %v615 = vpack.c.b16 %v551, %v547
        %v616 = vpack.c.b16 %v552, %v548
        %v617 = vpack.c.b16 %v553, %v549
        %v618 = vpack.c.b16 %v554, %v550
        %v717 = vunpack.c.l.b16 %v313
        %v718 = vunpack.c.l.b16 %v314
        %v719 = vunpack.c.l.b16 %v315
        %v720 = vunpack.c.l.b16 %v316
        %v721 = vunpack.c.l.b16 %v317
        %v722 = vunpack.c.l.b16 %v318
        %v723 = vunpack.c.l.b16 %v319
        %v724 = vunpack.c.l.b16 %v320
        %v725 = vunpack.c.l.b16 %v321
        %v726 = vunpack.c.l.b16 %v322
        %v727 = vunpack.c.l.b16 %v323
        %v728 = vunpack.c.l.b16 %v324
        %v729 = vunpack.c.l.b16 %v325
        %v730 = vunpack.c.l.b16 %v326
        %v731 = vunpack.c.l.b16 %v327
        %v732 = vunpack.c.l.b16 %v328
        %v733 = vunpack.c.l.b16 %v329
        %v734 = vunpack.c.l.b16 %v330
        %v735 = vunpack.c.l.b16 %v331
        %v736 = vunpack.c.l.b16 %v332
        %v737 = vunpack.c.l.b16 %v333
        %v738 = vunpack.c.l.b16 %v334
        %v739 = vunpack.c.l.b16 %v335
        %v740 = vunpack.c.l.b16 %v336
        %v741 = vunpack.c.l.b16 %v337
        %v742 = vunpack.c.l.b16 %v338
        %v743 = vunpack.c.l.b16 %v339
        %v744 = vunpack.c.l.b16 %v340
        %v745 = vunpack.c.l.b16 %v341
        %v746 = vunpack.c.l.b16 %v342
        %v747 = vunpack.c.l.b16 %v343
        %v748 = vunpack.c.l.b16 %v344
        %v749 = vunpack.c.l.b16 %v345
        %v750 = vunpack.c.l.b16 %v346
        %v751 = vunpack.c.l.b16 %v347
        %v752 = vunpack.c.l.b16 %v348
        %v753 = vunpack.c.l.b16 %v349
        %v754 = vunpack.c.l.b16 %v350
        %v755 = vunpack.c.l.b16 %v351
        %v756 = vunpack.c.l.b16 %v352
        %v757 = vunpack.c.l.b16 %v353
        %v758 = vunpack.c.l.b16 %v354
        %v759 = vunpack.c.l.b16 %v355
        %v760 = vunpack.c.l.b16 %v356
        %v761 = vunpack.c.l.b16 %v357
        %v762 = vunpack.c.l.b16 %v358
        %v763 = vunpack.c.l.b16 %v359
        %v764 = vunpack.c.l.b16 %v360
        %v765 = vunpack.c.l.b16 %v361
        %v766 = vunpack.c.l.b16 %v362
        %v767 = vpack.c.b16 %v718, %v717
        %v768 = vpack.c.b16 %v720, %v719
        %v769 = vpack.c.b16 %v722, %v721
        %v770 = vpack.c.b16 %v724, %v723
        %v771 = vpack.c.b16 %v726, %v725
        %v772 = vpack.c.b16 %v728, %v727
        %v773 = vpack.c.b16 %v730, %v729
        %v774 = vpack.c.b16 %v732, %v731
        %v775 = vpack.c.b16 %v734, %v733
        %v776 = vpack.c.b16 %v736, %v735
        %v777 = vpack.c.b16 %v738, %v737
        %v778 = vpack.c.b16 %v740, %v739
        %v779 = vpack.c.b16 %v742, %v741
        %v780 = vpack.c.b16 %v744, %v743
        %v781 = vpack.c.b16 %v746, %v745
        %v782 = vpack.c.b16 %v748, %v747
        %v783 = vpack.c.b16 %v750, %v749
        %v784 = vpack.c.b16 %v752, %v751
        %v785 = vpack.c.b16 %v754, %v753
        %v786 = vpack.c.b16 %v756, %v755
        %v787 = vpack.c.b16 %v758, %v757
        %v788 = vpack.c.b16 %v760, %v759
        %v789 = vpack.c.b16 %v762, %v761
        %v790 = vpack.c.b16 %v764, %v763
        %v791 = vpack.c.b16 %v766, %v765
        %vm817 = vcmask 130048
        %v819 = vsel %vm817, %v558, 0
        %v822 = vsel %vm817, %v562, 0
        %v825 = vsel %vm817, %v566, 0
        %v828 = vsel %vm817, %v570, 0
        %v831 = vsel %vm817, %v574, 0
        %v834 = vsel %vm817, %v578, 0
        %v837 = vsel %vm817, %v582, 0
        %v840 = vsel %vm817, %v586, 0
        %v843 = vsel %vm817, %v590, 0
        %v846 = vsel %vm817, %v594, 0
        %v849 = vsel %vm817, %v598, 0
        %v852 = vsel %vm817, %v602, 0
        %v855 = vsel %vm817, %v606, 0
        %v858 = vsel %vm817, %v610, 0
        %v861 = vsel %vm817, %v614, 0
        %v864 = vsel %vm817, %v618, 0
        %866 = vmatprep.subr.bf16.mxu0 0
        %867 = vmatpush1.bf16.msra.mxu0 %v767
        %868 = vmatprep.subr.bf16.mxu0 0
        %869 = vmatpush1.bf16.msra.mxu0 %v768
        %870 = vmatprep.subr.bf16.mxu0 0
        %871 = vmatpush1.bf16.msra.mxu0 %v769
        %872 = vmatprep.subr.bf16.mxu0 0
        %873 = vmatpush1.bf16.msra.mxu0 %v770
        %874 = vmatprep.subr.bf16.mxu0 0
        %875 = vmatpush1.bf16.msra.mxu0 %v771
        %876 = vmatprep.subr.bf16.mxu0 0
        %877 = vmatpush1.bf16.msra.mxu0 %v772
        %878 = vmatprep.subr.bf16.mxu0 0
        %879 = vmatpush1.bf16.msra.mxu0 %v773
        %880 = vmatprep.subr.bf16.mxu0 0
        %881 = vmatpush1.bf16.msra.mxu0 %v774
        %882 = vmatprep.subr.bf16.mxu0 0
        %883 = vmatpush1.bf16.msra.mxu0 %v775
        %884 = vmatprep.subr.bf16.mxu0 0
        %885 = vmatpush1.bf16.msra.mxu0 %v776
        %886 = vmatprep.subr.bf16.mxu0 0
        %887 = vmatpush1.bf16.msra.mxu0 %v777
        %888 = vmatprep.subr.bf16.mxu0 0
        %889 = vmatpush1.bf16.msra.mxu0 %v778
        %890 = vmatprep.subr.bf16.mxu0 0
        %891 = vmatpush1.bf16.msra.mxu0 %v779
        %892 = vmatprep.subr.bf16.mxu0 0
        %893 = vmatpush1.bf16.msra.mxu0 %v780
        %894 = vmatprep.subr.bf16.mxu0 0
        %895 = vmatpush1.bf16.msra.mxu0 %v781
        %896 = vmatprep.subr.bf16.mxu0 0
        %897 = vmatpush1.bf16.msra.mxu0 %v782
        %898 = vmatprep.mubr.bf16.mxu0 %v556
        %899 = vmatmul.mubr.bf16.gmra.mrb[0].mxu0 %v555
        %v900 = vpop.f32.mrb[0].mxu0
        %v901 = vadd.f32 0.0, %v900
        %v902 = vpop.f32.mrb[0].mxu0
        %v903 = vpop.f32.mrb[0].mxu0
        %v904 = vadd.f32 0.0, %v903
        %v905 = vpop.f32.mrb[0].mxu0
        %906 = vmatprep.mubr.bf16.mxu0 %v560
        %907 = vmatmul.mubr.bf16.gmra.mrb[0].mxu0 %v559
        %v908 = vpop.f32.mrb[0].mxu0
        %v909 = vadd.f32 0.0, %v908
        %v910 = vpop.f32.mrb[0].mxu0
        %v911 = vpop.f32.mrb[0].mxu0
        %v912 = vadd.f32 0.0, %v911
        %v913 = vpop.f32.mrb[0].mxu0
        %914 = vmatprep.mubr.bf16.mxu0 %v564
        %915 = vmatmul.mubr.bf16.gmra.mrb[0].mxu0 %v563
        %v916 = vpop.f32.mrb[0].mxu0
        %v917 = vadd.f32 0.0, %v916
        %v918 = vpop.f32.mrb[0].mxu0
        %v919 = vpop.f32.mrb[0].mxu0
        %v920 = vadd.f32 0.0, %v919
        %v921 = vpop.f32.mrb[0].mxu0
        %922 = vmatprep.mubr.bf16.mxu0 %v568
        %923 = vmatmul.mubr.bf16.gmra.mrb[0].mxu0 %v567
        %v924 = vpop.f32.mrb[0].mxu0
        %v925 = vadd.f32 0.0, %v924
        %v926 = vpop.f32.mrb[0].mxu0
        %v927 = vpop.f32.mrb[0].mxu0
        %v928 = vadd.f32 0.0, %v927
        %v929 = vpop.f32.mrb[0].mxu0
        %930 = vmatprep.mubr.bf16.mxu0 %v572
        %931 = vmatmul.mubr.bf16.gmra.mrb[0].mxu0 %v571
        %v932 = vpop.f32.mrb[0].mxu0
        %v933 = vadd.f32 0.0, %v932
        %v934 = vpop.f32.mrb[0].mxu0
        %v935 = vpop.f32.mrb[0].mxu0
        %v936 = vadd.f32 0.0, %v935
        %v937 = vpop.f32.mrb[0].mxu0
        %938 = vmatprep.mubr.bf16.mxu0 %v576
        %939 = vmatmul.mubr.bf16.gmra.mrb[0].mxu0 %v575
        %v940 = vpop.f32.mrb[0].mxu0
        %v941 = vadd.f32 0.0, %v940
        %v942 = vpop.f32.mrb[0].mxu0
        %v943 = vpop.f32.mrb[0].mxu0
        %v944 = vadd.f32 0.0, %v943
        %v945 = vpop.f32.mrb[0].mxu0
        %946 = vmatprep.mubr.bf16.mxu0 %v580
        %947 = vmatmul.mubr.bf16.gmra.mrb[0].mxu0 %v579
        %v948 = vpop.f32.mrb[0].mxu0
        %v949 = vadd.f32 0.0, %v948
        %v950 = vpop.f32.mrb[0].mxu0
        %v951 = vpop.f32.mrb[0].mxu0
        %v952 = vadd.f32 0.0, %v951
        %v953 = vpop.f32.mrb[0].mxu0
        %954 = vmatprep.mubr.bf16.mxu0 %v584
        %955 = vmatmul.mubr.bf16.gmra.mrb[0].mxu0 %v583
        %v956 = vpop.f32.mrb[0].mxu0
        %v957 = vadd.f32 0.0, %v956
        %v958 = vpop.f32.mrb[0].mxu0
        %v959 = vpop.f32.mrb[0].mxu0
        %v960 = vadd.f32 0.0, %v959
        %v961 = vpop.f32.mrb[0].mxu0
        %962 = vmatprep.mubr.bf16.mxu0 %v588
        %963 = vmatmul.mubr.bf16.gmra.mrb[0].mxu0 %v587
        %v964 = vpop.f32.mrb[0].mxu0
        %v965 = vadd.f32 0.0, %v964
        %v966 = vpop.f32.mrb[0].mxu0
        %v967 = vpop.f32.mrb[0].mxu0
        %v968 = vadd.f32 0.0, %v967
        %v969 = vpop.f32.mrb[0].mxu0
        %970 = vmatprep.mubr.bf16.mxu0 %v592
        %971 = vmatmul.mubr.bf16.gmra.mrb[0].mxu0 %v591
        %v972 = vpop.f32.mrb[0].mxu0
        %v973 = vadd.f32 0.0, %v972
        %v974 = vpop.f32.mrb[0].mxu0
        %v975 = vpop.f32.mrb[0].mxu0
        %v976 = vadd.f32 0.0, %v975
        %v977 = vpop.f32.mrb[0].mxu0
        %978 = vmatprep.mubr.bf16.mxu0 %v596
        %979 = vmatmul.mubr.bf16.gmra.mrb[0].mxu0 %v595
        %v980 = vpop.f32.mrb[0].mxu0
        %v981 = vadd.f32 0.0, %v980
        %v982 = vpop.f32.mrb[0].mxu0
        %v983 = vpop.f32.mrb[0].mxu0
        %v984 = vadd.f32 0.0, %v983
        %v985 = vpop.f32.mrb[0].mxu0
        %986 = vmatprep.mubr.bf16.mxu0 %v600
        %987 = vmatmul.mubr.bf16.gmra.mrb[0].mxu0 %v599
        %v988 = vpop.f32.mrb[0].mxu0
        %v989 = vadd.f32 0.0, %v988
        %v990 = vpop.f32.mrb[0].mxu0
        %v991 = vpop.f32.mrb[0].mxu0
        %v992 = vadd.f32 0.0, %v991
        %v993 = vpop.f32.mrb[0].mxu0
        %994 = vmatprep.mubr.bf16.mxu0 %v604
        %995 = vmatmul.mubr.bf16.gmra.mrb[0].mxu0 %v603
        %v996 = vpop.f32.mrb[0].mxu0
        %v997 = vadd.f32 0.0, %v996
        %v998 = vpop.f32.mrb[0].mxu0
        %v999 = vpop.f32.mrb[0].mxu0
        %v1000 = vadd.f32 0.0, %v999
        %v1001 = vpop.f32.mrb[0].mxu0
        %1002 = vmatprep.mubr.bf16.mxu0 %v608
        %1003 = vmatmul.mubr.bf16.gmra.mrb[0].mxu0 %v607
        %v1004 = vpop.f32.mrb[0].mxu0
        %v1005 = vadd.f32 0.0, %v1004
        %v1006 = vpop.f32.mrb[0].mxu0
        %v1007 = vpop.f32.mrb[0].mxu0
        %v1008 = vadd.f32 0.0, %v1007
        %v1009 = vpop.f32.mrb[0].mxu0
        %1010 = vmatprep.mubr.bf16.mxu0 %v612
        %1011 = vmatmul.mubr.bf16.gmra.mrb[0].mxu0 %v611
        %v1012 = vpop.f32.mrb[0].mxu0
        %v1013 = vadd.f32 0.0, %v1012
        %v1014 = vpop.f32.mrb[0].mxu0
        %v1015 = vpop.f32.mrb[0].mxu0
        %v1016 = vadd.f32 0.0, %v1015
        %v1017 = vpop.f32.mrb[0].mxu0
        %1018 = vmatprep.mubr.bf16.mxu0 %v616
        %1019 = vmatmul.mubr.bf16.gmra.mrb[0].mxu0 %v615
        %v1020 = vpop.f32.mrb[0].mxu0
        %v1021 = vadd.f32 0.0, %v1020
        %v1022 = vpop.f32.mrb[0].mxu0
        %v1023 = vpop.f32.mrb[0].mxu0
        %v1024 = vadd.f32 0.0, %v1023
        %v1025 = vpop.f32.mrb[0].mxu0
        %1026 = vdwg.mxu0
        %1027 = vmatprep.subr.bf16.mxu0 0
        %1028 = vmatpush1.bf16.msra.mxu0 %v783
        %1029 = vmatprep.subr.bf16.mxu0 0
        %1030 = vmatpush1.bf16.msra.mxu0 %v784
        %1031 = vmatprep.subr.bf16.mxu0 0
        %1032 = vmatpush1.bf16.msra.mxu0 %v785
        %1033 = vmatprep.subr.bf16.mxu0 0
        %1034 = vmatpush1.bf16.msra.mxu0 %v786
        %1035 = vmatprep.subr.bf16.mxu0 0
        %1036 = vmatpush1.bf16.msra.mxu0 %v787
        %1037 = vmatprep.subr.bf16.mxu0 0
        %1038 = vmatpush1.bf16.msra.mxu0 %v788
        %1039 = vmatprep.subr.bf16.mxu0 0
        %1040 = vmatpush1.bf16.msra.mxu0 %v789
        %1041 = vmatprep.subr.bf16.mxu0 0
        %1042 = vmatpush1.bf16.msra.mxu0 %v790
        %1043 = vmatprep.subr.bf16.mxu0 0
        %1044 = vmatpush1.bf16.msra.mxu0 %v791
        %1045 = vmatprep.subr.bf16.mxu0 0
        %1046 = vmatpush1.bf16.msra.mxu0 0
        %1047 = vmatprep.subr.bf16.mxu0 0
        %1048 = vmatpush1.bf16.msra.mxu0 0
        %1049 = vmatprep.subr.bf16.mxu0 0
        %1050 = vmatpush1.bf16.msra.mxu0 0
        %1051 = vmatprep.subr.bf16.mxu0 0
        %1052 = vmatpush1.bf16.msra.mxu0 0
        %1053 = vmatprep.subr.bf16.mxu0 0
        %1054 = vmatpush1.bf16.msra.mxu0 0
        %1055 = vmatprep.subr.bf16.mxu0 0
        %1056 = vmatpush1.bf16.msra.mxu0 0
        %1057 = vmatprep.subr.bf16.mxu0 0
        %1058 = vmatpush1.bf16.msra.mxu0 0
        %1059 = vmatprep.mubr.bf16.mxu0 %v819
        %1060 = vmatmul.mubr.bf16.gmra.mrb[0].mxu0 %v557
        %v1061 = vpop.f32.mrb[0].mxu0
        %v1062 = vadd.f32 %v901, %v1061
        %v1063 = vpop.f32.mrb[0].mxu0
        %v1064 = vpop.f32.mrb[0].mxu0
        %v1065 = vadd.f32 %v904, %v1064
        %v1066 = vpop.f32.mrb[0].mxu0
        %1067 = vmatprep.mubr.bf16.mxu0 %v822
        %1068 = vmatmul.mubr.bf16.gmra.mrb[0].mxu0 %v561
        %v1069 = vpop.f32.mrb[0].mxu0
        %v1070 = vadd.f32 %v909, %v1069
        %v1071 = vpop.f32.mrb[0].mxu0
        %v1072 = vpop.f32.mrb[0].mxu0
        %v1073 = vadd.f32 %v912, %v1072
        %v1074 = vpop.f32.mrb[0].mxu0
        %1075 = vmatprep.mubr.bf16.mxu0 %v825
        %1076 = vmatmul.mubr.bf16.gmra.mrb[0].mxu0 %v565
        %v1077 = vpop.f32.mrb[0].mxu0
        %v1078 = vadd.f32 %v917, %v1077
        %v1079 = vpop.f32.mrb[0].mxu0
        %v1080 = vpop.f32.mrb[0].mxu0
        %v1081 = vadd.f32 %v920, %v1080
        %v1082 = vpop.f32.mrb[0].mxu0
        %1083 = vmatprep.mubr.bf16.mxu0 %v828
        %1084 = vmatmul.mubr.bf16.gmra.mrb[0].mxu0 %v569
        %v1085 = vpop.f32.mrb[0].mxu0
        %v1086 = vadd.f32 %v925, %v1085
        %v1087 = vpop.f32.mrb[0].mxu0
        %v1088 = vpop.f32.mrb[0].mxu0
        %v1089 = vadd.f32 %v928, %v1088
        %v1090 = vpop.f32.mrb[0].mxu0
        %1091 = vmatprep.mubr.bf16.mxu0 %v831
        %1092 = vmatmul.mubr.bf16.gmra.mrb[0].mxu0 %v573
        %v1093 = vpop.f32.mrb[0].mxu0
        %v1094 = vadd.f32 %v933, %v1093
        %v1095 = vpop.f32.mrb[0].mxu0
        %v1096 = vpop.f32.mrb[0].mxu0
        %v1097 = vadd.f32 %v936, %v1096
        %v1098 = vpop.f32.mrb[0].mxu0
        %1099 = vmatprep.mubr.bf16.mxu0 %v834
        %1100 = vmatmul.mubr.bf16.gmra.mrb[0].mxu0 %v577
        %v1101 = vpop.f32.mrb[0].mxu0
        %v1102 = vadd.f32 %v941, %v1101
        %v1103 = vpop.f32.mrb[0].mxu0
        %v1104 = vpop.f32.mrb[0].mxu0
        %v1105 = vadd.f32 %v944, %v1104
        %v1106 = vpop.f32.mrb[0].mxu0
        %1107 = vmatprep.mubr.bf16.mxu0 %v837
        %1108 = vmatmul.mubr.bf16.gmra.mrb[0].mxu0 %v581
        %v1109 = vpop.f32.mrb[0].mxu0
        %v1110 = vadd.f32 %v949, %v1109
        %v1111 = vpop.f32.mrb[0].mxu0
        %v1112 = vpop.f32.mrb[0].mxu0
        %v1113 = vadd.f32 %v952, %v1112
        %v1114 = vpop.f32.mrb[0].mxu0
        %1115 = vmatprep.mubr.bf16.mxu0 %v840
        %1116 = vmatmul.mubr.bf16.gmra.mrb[0].mxu0 %v585
        %v1117 = vpop.f32.mrb[0].mxu0
        %v1118 = vadd.f32 %v957, %v1117
        %v1119 = vpop.f32.mrb[0].mxu0
        %v1120 = vpop.f32.mrb[0].mxu0
        %v1121 = vadd.f32 %v960, %v1120
        %v1122 = vpop.f32.mrb[0].mxu0
        %1123 = vmatprep.mubr.bf16.mxu0 %v843
        %1124 = vmatmul.mubr.bf16.gmra.mrb[0].mxu0 %v589
        %v1125 = vpop.f32.mrb[0].mxu0
        %v1126 = vadd.f32 %v965, %v1125
        %v1127 = vpop.f32.mrb[0].mxu0
        %v1128 = vpop.f32.mrb[0].mxu0
        %v1129 = vadd.f32 %v968, %v1128
        %v1130 = vpop.f32.mrb[0].mxu0
        %1131 = vmatprep.mubr.bf16.mxu0 %v846
        %1132 = vmatmul.mubr.bf16.gmra.mrb[0].mxu0 %v593
        %v1133 = vpop.f32.mrb[0].mxu0
        %v1134 = vadd.f32 %v973, %v1133
        %v1135 = vpop.f32.mrb[0].mxu0
        %v1136 = vpop.f32.mrb[0].mxu0
        %v1137 = vadd.f32 %v976, %v1136
        %v1138 = vpop.f32.mrb[0].mxu0
        %1139 = vmatprep.mubr.bf16.mxu0 %v849
        %1140 = vmatmul.mubr.bf16.gmra.mrb[0].mxu0 %v597
        %v1141 = vpop.f32.mrb[0].mxu0
        %v1142 = vadd.f32 %v981, %v1141
        %v1143 = vpop.f32.mrb[0].mxu0
        %v1144 = vpop.f32.mrb[0].mxu0
        %v1145 = vadd.f32 %v984, %v1144
        %v1146 = vpop.f32.mrb[0].mxu0
        %1147 = vmatprep.mubr.bf16.mxu0 %v852
        %1148 = vmatmul.mubr.bf16.gmra.mrb[0].mxu0 %v601
        %v1149 = vpop.f32.mrb[0].mxu0
        %v1150 = vadd.f32 %v989, %v1149
        %v1151 = vpop.f32.mrb[0].mxu0
        %v1152 = vpop.f32.mrb[0].mxu0
        %v1153 = vadd.f32 %v992, %v1152
        %v1154 = vpop.f32.mrb[0].mxu0
        %1155 = vmatprep.mubr.bf16.mxu0 %v855
        %1156 = vmatmul.mubr.bf16.gmra.mrb[0].mxu0 %v605
        %v1157 = vpop.f32.mrb[0].mxu0
        %v1158 = vadd.f32 %v997, %v1157
        %v1159 = vpop.f32.mrb[0].mxu0
        %v1160 = vpop.f32.mrb[0].mxu0
        %v1161 = vadd.f32 %v1000, %v1160
        %v1162 = vpop.f32.mrb[0].mxu0
        %1163 = vmatprep.mubr.bf16.mxu0 %v858
        %1164 = vmatmul.mubr.bf16.gmra.mrb[0].mxu0 %v609
        %v1165 = vpop.f32.mrb[0].mxu0
        %v1166 = vadd.f32 %v1005, %v1165
        %v1167 = vpop.f32.mrb[0].mxu0
        %v1168 = vpop.f32.mrb[0].mxu0
        %v1169 = vadd.f32 %v1008, %v1168
        %v1170 = vpop.f32.mrb[0].mxu0
        %1171 = vmatprep.mubr.bf16.mxu0 %v861
        %1172 = vmatmul.mubr.bf16.gmra.mrb[0].mxu0 %v613
        %v1173 = vpop.f32.mrb[0].mxu0
        %v1174 = vadd.f32 %v1013, %v1173
        %v1175 = vpop.f32.mrb[0].mxu0
        %v1176 = vpop.f32.mrb[0].mxu0
        %v1177 = vadd.f32 %v1016, %v1176
        %v1178 = vpop.f32.mrb[0].mxu0
        %1179 = vmatprep.mubr.bf16.mxu0 %v864
        %1180 = vmatmul.mubr.bf16.gmra.mrb[0].mxu0 %v617
        %v1181 = vpop.f32.mrb[0].mxu0
        %v1182 = vadd.f32 %v1021, %v1181
        %v1183 = vpop.f32.mrb[0].mxu0
        %v1184 = vpop.f32.mrb[0].mxu0
        %v1185 = vadd.f32 %v1024, %v1184
        %v1186 = vpop.f32.mrb[0].mxu0
        %1187 = vdwg.mxu0
        %v1188 = vld [vmem:[%s2] sm:$0xff]
        %v1189 = vld [vmem:[%s2 + $0x8] sm:$0xff]
        %v1190 = vld [vmem:[%s2 + $0x10] sm:$0xff]
        %v1191 = vld [vmem:[%s2 + $0x18] sm:$0xff]
        %v1192 = vld [vmem:[%s3] sm:$0xff]
        %v1193 = vld [vmem:[%s3 + $0x8] sm:$0xff]
        %v1194 = vld [vmem:[%s3 + $0x10] sm:$0xff]
        %v1195 = vld [vmem:[%s3 + $0x18] sm:$0xff]
        %v1196 = vld [vmem:[%s3 + $0x20] sm:$0xff]
        %v1197 = vld [vmem:[%s3 + $0x28] sm:$0xff]
        %v1198 = vld [vmem:[%s3 + $0x30] sm:$0xff]
        %v1199 = vld [vmem:[%s3 + $0x38] sm:$0xff]
        %v1200 = vld [vmem:[%s3 + $0x40] sm:$0xff]
        %v1201 = vld [vmem:[%s3 + $0x48] sm:$0xff]
        %v1202 = vld [vmem:[%s3 + $0x50] sm:$0xff]
        %v1203 = vld [vmem:[%s3 + $0x58] sm:$0xff]
        %v1204 = vld [vmem:[%s3 + $0x60] sm:$0xff]
        %v1205 = vld [vmem:[%s3 + $0x68] sm:$0xff]
        %v1206 = vld [vmem:[%s3 + $0x70] sm:$0xff]
        %v1207 = vld [vmem:[%s3 + $0x78] sm:$0xff]
        %v1208 = vld [vmem:[%s3 + $0x80] sm:$0xff]
        %v1209 = vld [vmem:[%s3 + $0x88] sm:$0xff]
        %v1210 = vld [vmem:[%s3 + $0x90] sm:$0xff]
        %v1211 = vld [vmem:[%s3 + $0x98] sm:$0xff]
        %v1212 = vld [vmem:[%s3 + $0xa0] sm:$0xff]
        %v1213 = vld [vmem:[%s3 + $0xa8] sm:$0xff]
        %v1214 = vld [vmem:[%s3 + $0xb0] sm:$0xff]
        %v1215 = vld [vmem:[%s3 + $0xb8] sm:$0xff]
        %v1216 = vld [vmem:[%s3 + $0xc0] sm:$0xff]
        %v1217 = vld [vmem:[%s3 + $0xc8] sm:$0xff]
        %v1218 = vld [vmem:[%s3 + $0xd0] sm:$0xff]
        %v1219 = vld [vmem:[%s3 + $0xd8] sm:$0xff]
        %v1220 = vld [vmem:[%s3 + $0xe0] sm:$0xff]
        %v1221 = vld [vmem:[%s3 + $0xe8] sm:$0xff]
        %v1222 = vld [vmem:[%s3 + $0xf0] sm:$0xff]
        %v1223 = vld [vmem:[%s3 + $0xf8] sm:$0xff]
        %1225 = vset.pattern.permute.xlu0 0
        %1226 = vperm.xlu0 %1225, %v1188
        %v1227 = vpop.permute.xlu0 %1226
        %1230 = vset.pattern.permute.xlu0 0
        %1231 = vperm.xlu0 %1230, %v1189
        %v1232 = vpop.permute.xlu0 %1231
        %1235 = vset.pattern.permute.xlu0 0
        %1236 = vperm.xlu0 %1235, %v1190
        %v1237 = vpop.permute.xlu0 %1236
        %1240 = vset.pattern.permute.xlu0 0
        %1241 = vperm.xlu0 %1240, %v1191
        %v1242 = vpop.permute.xlu0 %1241
        %v1244 = vadd.f32 %v1062, %v1227
        %v1245 = vadd.f32 %v1065, %v1232
        %v1246 = vadd.f32 %v1070, %v1237
        %v1247 = vadd.f32 %v1073, %v1242
        %v1248 = vmax.f32 %v1244, 0.0
        %v1249 = vmax.f32 %v1245, 0.0
        %v1250 = vmax.f32 %v1246, 0.0
        %v1251 = vmax.f32 %v1247, 0.0
        %1253 = vset.pattern.permute.xlu0 0
        %1254 = vperm.xlu0 %1253, %v1192
        %v1255 = vpop.permute.xlu0 %1254
        %1258 = vset.pattern.permute.xlu0 0
        %1259 = vperm.xlu0 %1258, %v1193
        %v1260 = vpop.permute.xlu0 %1259
        %1263 = vset.pattern.permute.xlu0 0
        %1264 = vperm.xlu0 %1263, %v1194
        %v1265 = vpop.permute.xlu0 %1264
        %1268 = vset.pattern.permute.xlu0 0
        %1269 = vperm.xlu0 %1268, %v1195
        %v1270 = vpop.permute.xlu0 %1269
        %v1272 = vmul.f32 %v1248, %v1255
        %v1273 = vmul.f32 %v1249, %v1260
        %v1274 = vmul.f32 %v1250, %v1265
        %v1275 = vmul.f32 %v1251, %v1270
        %v1276 = vadd.f32 %v1078, %v1227
        %v1277 = vadd.f32 %v1081, %v1232
        %v1278 = vadd.f32 %v1086, %v1237
        %v1279 = vadd.f32 %v1089, %v1242
        %v1280 = vmax.f32 %v1276, 0.0
        %v1281 = vmax.f32 %v1277, 0.0
        %v1282 = vmax.f32 %v1278, 0.0
        %v1283 = vmax.f32 %v1279, 0.0
        %1285 = vset.pattern.permute.xlu0 0
        %1286 = vperm.xlu0 %1285, %v1196
        %v1287 = vpop.permute.xlu0 %1286
        %1290 = vset.pattern.permute.xlu0 0
        %1291 = vperm.xlu0 %1290, %v1197
        %v1292 = vpop.permute.xlu0 %1291
        %1295 = vset.pattern.permute.xlu0 0
        %1296 = vperm.xlu0 %1295, %v1198
        %v1297 = vpop.permute.xlu0 %1296
        %1300 = vset.pattern.permute.xlu0 0
        %1301 = vperm.xlu0 %1300, %v1199
        %v1302 = vpop.permute.xlu0 %1301
        %v1304 = vmul.f32 %v1280, %v1287
        %v1305 = vmul.f32 %v1281, %v1292
        %v1306 = vmul.f32 %v1282, %v1297
        %v1307 = vmul.f32 %v1283, %v1302
        %v1308 = vadd.f32 %v1272, %v1304
        %v1309 = vadd.f32 %v1273, %v1305
        %v1310 = vadd.f32 %v1274, %v1306
        %v1311 = vadd.f32 %v1275, %v1307
        %v1312 = vadd.f32 %v1094, %v1227
        %v1313 = vadd.f32 %v1097, %v1232
        %v1314 = vadd.f32 %v1102, %v1237
        %v1315 = vadd.f32 %v1105, %v1242
        %v1316 = vmax.f32 %v1312, 0.0
        %v1317 = vmax.f32 %v1313, 0.0
        %v1318 = vmax.f32 %v1314, 0.0
        %v1319 = vmax.f32 %v1315, 0.0
        %1321 = vset.pattern.permute.xlu0 0
        %1322 = vperm.xlu0 %1321, %v1200
        %v1323 = vpop.permute.xlu0 %1322
        %1326 = vset.pattern.permute.xlu0 0
        %1327 = vperm.xlu0 %1326, %v1201
        %v1328 = vpop.permute.xlu0 %1327
        %1331 = vset.pattern.permute.xlu0 0
        %1332 = vperm.xlu0 %1331, %v1202
        %v1333 = vpop.permute.xlu0 %1332
        %1336 = vset.pattern.permute.xlu0 0
        %1337 = vperm.xlu0 %1336, %v1203
        %v1338 = vpop.permute.xlu0 %1337
        %v1340 = vmul.f32 %v1316, %v1323
        %v1341 = vmul.f32 %v1317, %v1328
        %v1342 = vmul.f32 %v1318, %v1333
        %v1343 = vmul.f32 %v1319, %v1338
        %v1344 = vadd.f32 %v1308, %v1340
        %v1345 = vadd.f32 %v1309, %v1341
        %v1346 = vadd.f32 %v1310, %v1342
        %v1347 = vadd.f32 %v1311, %v1343
        %v1348 = vadd.f32 %v1110, %v1227
        %v1349 = vadd.f32 %v1113, %v1232
        %v1350 = vadd.f32 %v1118, %v1237
        %v1351 = vadd.f32 %v1121, %v1242
        %v1352 = vmax.f32 %v1348, 0.0
        %v1353 = vmax.f32 %v1349, 0.0
        %v1354 = vmax.f32 %v1350, 0.0
        %v1355 = vmax.f32 %v1351, 0.0
        %1357 = vset.pattern.permute.xlu0 0
        %1358 = vperm.xlu0 %1357, %v1204
        %v1359 = vpop.permute.xlu0 %1358
        %1362 = vset.pattern.permute.xlu0 0
        %1363 = vperm.xlu0 %1362, %v1205
        %v1364 = vpop.permute.xlu0 %1363
        %1367 = vset.pattern.permute.xlu0 0
        %1368 = vperm.xlu0 %1367, %v1206
        %v1369 = vpop.permute.xlu0 %1368
        %1372 = vset.pattern.permute.xlu0 0
        %1373 = vperm.xlu0 %1372, %v1207
        %v1374 = vpop.permute.xlu0 %1373
        %v1376 = vmul.f32 %v1352, %v1359
        %v1377 = vmul.f32 %v1353, %v1364
        %v1378 = vmul.f32 %v1354, %v1369
        %v1379 = vmul.f32 %v1355, %v1374
        %v1380 = vadd.f32 %v1344, %v1376
        %v1381 = vadd.f32 %v1345, %v1377
        %v1382 = vadd.f32 %v1346, %v1378
        %v1383 = vadd.f32 %v1347, %v1379
        %v1384 = vadd.f32 %v1126, %v1227
        %v1385 = vadd.f32 %v1129, %v1232
        %v1386 = vadd.f32 %v1134, %v1237
        %v1387 = vadd.f32 %v1137, %v1242
        %v1388 = vmax.f32 %v1384, 0.0
        %v1389 = vmax.f32 %v1385, 0.0
        %v1390 = vmax.f32 %v1386, 0.0
        %v1391 = vmax.f32 %v1387, 0.0
        %1393 = vset.pattern.permute.xlu0 0
        %1394 = vperm.xlu0 %1393, %v1208
        %v1395 = vpop.permute.xlu0 %1394
        %1398 = vset.pattern.permute.xlu0 0
        %1399 = vperm.xlu0 %1398, %v1209
        %v1400 = vpop.permute.xlu0 %1399
        %1403 = vset.pattern.permute.xlu0 0
        %1404 = vperm.xlu0 %1403, %v1210
        %v1405 = vpop.permute.xlu0 %1404
        %1408 = vset.pattern.permute.xlu0 0
        %1409 = vperm.xlu0 %1408, %v1211
        %v1410 = vpop.permute.xlu0 %1409
        %v1412 = vmul.f32 %v1388, %v1395
        %v1413 = vmul.f32 %v1389, %v1400
        %v1414 = vmul.f32 %v1390, %v1405
        %v1415 = vmul.f32 %v1391, %v1410
        %v1416 = vadd.f32 %v1380, %v1412
        %v1417 = vadd.f32 %v1381, %v1413
        %v1418 = vadd.f32 %v1382, %v1414
        %v1419 = vadd.f32 %v1383, %v1415
        %v1420 = vadd.f32 %v1142, %v1227
        %v1421 = vadd.f32 %v1145, %v1232
        %v1422 = vadd.f32 %v1150, %v1237
        %v1423 = vadd.f32 %v1153, %v1242
        %v1424 = vmax.f32 %v1420, 0.0
        %v1425 = vmax.f32 %v1421, 0.0
        %v1426 = vmax.f32 %v1422, 0.0
        %v1427 = vmax.f32 %v1423, 0.0
        %1429 = vset.pattern.permute.xlu0 0
        %1430 = vperm.xlu0 %1429, %v1212
        %v1431 = vpop.permute.xlu0 %1430
        %1434 = vset.pattern.permute.xlu0 0
        %1435 = vperm.xlu0 %1434, %v1213
        %v1436 = vpop.permute.xlu0 %1435
        %1439 = vset.pattern.permute.xlu0 0
        %1440 = vperm.xlu0 %1439, %v1214
        %v1441 = vpop.permute.xlu0 %1440
        %1444 = vset.pattern.permute.xlu0 0
        %1445 = vperm.xlu0 %1444, %v1215
        %v1446 = vpop.permute.xlu0 %1445
        %v1448 = vmul.f32 %v1424, %v1431
        %v1449 = vmul.f32 %v1425, %v1436
        %v1450 = vmul.f32 %v1426, %v1441
        %v1451 = vmul.f32 %v1427, %v1446
        %v1452 = vadd.f32 %v1416, %v1448
        %v1453 = vadd.f32 %v1417, %v1449
        %v1454 = vadd.f32 %v1418, %v1450
        %v1455 = vadd.f32 %v1419, %v1451
        %v1456 = vadd.f32 %v1158, %v1227
        %v1457 = vadd.f32 %v1161, %v1232
        %v1458 = vadd.f32 %v1166, %v1237
        %v1459 = vadd.f32 %v1169, %v1242
        %v1460 = vmax.f32 %v1456, 0.0
        %v1461 = vmax.f32 %v1457, 0.0
        %v1462 = vmax.f32 %v1458, 0.0
        %v1463 = vmax.f32 %v1459, 0.0
        %1465 = vset.pattern.permute.xlu0 0
        %1466 = vperm.xlu0 %1465, %v1216
        %v1467 = vpop.permute.xlu0 %1466
        %1470 = vset.pattern.permute.xlu0 0
        %1471 = vperm.xlu0 %1470, %v1217
        %v1472 = vpop.permute.xlu0 %1471
        %1475 = vset.pattern.permute.xlu0 0
        %1476 = vperm.xlu0 %1475, %v1218
        %v1477 = vpop.permute.xlu0 %1476
        %1480 = vset.pattern.permute.xlu0 0
        %1481 = vperm.xlu0 %1480, %v1219
        %v1482 = vpop.permute.xlu0 %1481
        %v1484 = vmul.f32 %v1460, %v1467
        %v1485 = vmul.f32 %v1461, %v1472
        %v1486 = vmul.f32 %v1462, %v1477
        %v1487 = vmul.f32 %v1463, %v1482
        %v1488 = vadd.f32 %v1452, %v1484
        %v1489 = vadd.f32 %v1453, %v1485
        %v1490 = vadd.f32 %v1454, %v1486
        %v1491 = vadd.f32 %v1455, %v1487
        %v1492 = vadd.f32 %v1174, %v1227
        %v1493 = vadd.f32 %v1177, %v1232
        %v1494 = vadd.f32 %v1182, %v1237
        %v1495 = vadd.f32 %v1185, %v1242
        %v1496 = vmax.f32 %v1492, 0.0
        %v1497 = vmax.f32 %v1493, 0.0
        %v1498 = vmax.f32 %v1494, 0.0
        %v1499 = vmax.f32 %v1495, 0.0
        %1501 = vset.pattern.permute.xlu0 0
        %1502 = vperm.xlu0 %1501, %v1220
        %v1503 = vpop.permute.xlu0 %1502
        %1506 = vset.pattern.permute.xlu0 0
        %1507 = vperm.xlu0 %1506, %v1221
        %v1508 = vpop.permute.xlu0 %1507
        %1511 = vset.pattern.permute.xlu0 0
        %1512 = vperm.xlu0 %1511, %v1222
        %v1513 = vpop.permute.xlu0 %1512
        %1516 = vset.pattern.permute.xlu0 0
        %1517 = vperm.xlu0 %1516, %v1223
        %v1518 = vpop.permute.xlu0 %1517
        %v1520 = vmul.f32 %v1496, %v1503
        %v1521 = vmul.f32 %v1497, %v1508
        %v1522 = vmul.f32 %v1498, %v1513
        %v1523 = vmul.f32 %v1499, %v1518
        %v1524 = vadd.f32 %v1488, %v1520
        %v1525 = vadd.f32 %v1489, %v1521
        %v1526 = vadd.f32 %v1490, %v1522
        %v1527 = vadd.f32 %v1491, %v1523
        %v1528 = vld [vmem:[%s4] sm:$0xff]
        %v1529 = vld [vmem:[%s4 + $0x8] sm:$0xff]
        %v1530 = vld [vmem:[%s4 + $0x10] sm:$0xff]
        %v1531 = vld [vmem:[%s4 + $0x18] sm:$0xff]
        %1533 = vset.pattern.permute.xlu0 0
        %1534 = vperm.xlu0 %1533, %v1528
        %v1535 = vpop.permute.xlu0 %1534
        %1538 = vset.pattern.permute.xlu0 0
        %1539 = vperm.xlu0 %1538, %v1529
        %v1540 = vpop.permute.xlu0 %1539
        %1543 = vset.pattern.permute.xlu0 0
        %1544 = vperm.xlu0 %1543, %v1530
        %v1545 = vpop.permute.xlu0 %1544
        %1548 = vset.pattern.permute.xlu0 0
        %1549 = vperm.xlu0 %1548, %v1531
        %v1550 = vpop.permute.xlu0 %1549
        %v1552 = vadd.f32 %v1524, %v1535
        %v1553 = vadd.f32 %v1525, %v1540
        %v1554 = vadd.f32 %v1526, %v1545
        %v1555 = vadd.f32 %v1527, %v1550
        %v1556 = vmax.f32 %v1552, 0.0
        %v1557 = vmax.f32 %v1553, 0.0
        %v1558 = vmax.f32 %v1554, 0.0
        %v1559 = vmax.f32 %v1555, 0.0
        %1560 = vst [vmem:[%s239] sm:$0xff] %v1556
        %1561 = vst [vmem:[%s239 + $0x8] sm:$0xff] %v1557
        %1562 = vst [vmem:[%s239 + $0x10] sm:$0xff] %v1558
        %1563 = vst [vmem:[%s239 + $0x18] sm:$0xff] %v1559
        %s1564 = sand.u32 %s153, 1
        %s1565 = scalar_lea.sflag [#allocation3], %s1564
        %s1566 = sand.u32 %s153, 1
        %s1567 = smul.addr %s1566, 32
        %s1568 = scalar_lea.vmem [#allocation2], %s1567
        // Predicated region
        $region41: #{tpu_custom_call.1} parent=39 // pred_check
          %p1569 = pneg %p163
        $region42: #{tpu_custom_call.1} parent=39 // pred_check_branch
          %1571 = sbr.rel (%p1569) target = $region44
        $region43: #{tpu_custom_call.1} parent=39 // pred_region
          %s1573 = ssub.s32 512, 512
          %1574 = vsyncadd %s1565, %s1573
          %s1575 = smul.addr %s23, 4
          %s1576 = sadd.s32 %s24, %s1575
          %s1577 = smul.addr %s1576, 128
          %s1578 = scalar_lea.hbm %s5, %s1577
          %s1579 = sshll.u32 %s1568, 4
          %s1580 = int_to_ptr.vmem [resolvable:$true] %s1579
          %1585 = dma.vmem_to_hbm [thread:$0]  %s1580, 512, %s1578, %s1565, 128, 128, 8
        $region44: #{tpu_custom_call.1} parent=39 // pred_fallthru
          _
      $region40: #{tpu_custom_call.1} parent=5 // pred_fallthru
        _
      %p1586 = scmp.le.s32.totalorder 2, %s14
      // Predicated region
      $region45: #{tpu_custom_call.1} parent=5 // pred_check
        %p1587 = pneg %p1586
      $region46: #{tpu_custom_call.1} parent=5 // pred_check_branch
        %1589 = sbr.rel (%p1587) target = $region48
      $region47: #{tpu_custom_call.1} parent=5 // pred_region
        %s1590 = ssub.s32 %s14, 2
        // Predicated region
        $region49: #{tpu_custom_call.1} parent=47 // pred_check
          %p1591 = pneg %p169
        $region50: #{tpu_custom_call.1} parent=47 // pred_check_branch
          %1593 = sbr.rel (%p1591) target = $region52
        $region51: #{tpu_custom_call.1} parent=47 // pred_region
          %s1594 = sand.u32 %s154, 1
          %s1595 = scalar_lea.sflag [#allocation3], %s1594
          %s1596 = sand.u32 %s154, 1
          %s1597 = smul.addr %s1596, 32
          %s1598 = scalar_lea.vmem [#allocation2], %s1597
          %1599 = dma.done %s1595, 512
        $region52: #{tpu_custom_call.1} parent=47 // pred_fallthru
          _
      $region48: #{tpu_custom_call.1} parent=5 // pred_fallthru
        _
    $region6: #{tpu_custom_call.1} parent=1 // loop_footer
      %s18 = sadd.s32 1, %s14
    $region7: #{tpu_custom_call.1} parent=1 // loop_footer_branch
      %13 = sbr.rel target = $region3
    $region8: #{tpu_custom_call.1} parent=1 // loop_exit
      _
    %1600 = vsyncpa [#allocation3], 1
    %s1601 = scalar_lea.sflag [#allocation3], 1
    %1602 = vsyncpa %s1601, 1

</llo_original>
